<compile_context>
chip_gen: v7x
topology: tpu7x:2x2x1
jax: 0.10.0
libtpu: 0.0.40
codegen_flags: <defaults>
</compile_context>

<pallas_src>
import functools
import math

import jax
import jax.numpy as jnp
from jax.experimental import pallas as pl
from jax.experimental.pallas import tpu as pltpu

LN_EPS = 1e-5      # PyTorch nn.LayerNorm default
NEG_INF = -1e6     # d2l.masked_softmax surrogate for -inf


def _layernorm(x, gamma, beta):
    mean = jnp.mean(x, axis=-1, keepdims=True)
    var = jnp.mean(jnp.square(x - mean), axis=-1, keepdims=True)
    return (x - mean) * jax.lax.rsqrt(var + LN_EPS) * gamma + beta


def encoder_block_kernel(
    nh,                                   # static (bound via functools.partial)
    vl_ref,                               # scalar prefetch: (B,) int32 in SMEM
    x_ref,                                # (1, S, H) fp32
    wqkv_ref, bqkv_ref,                   # (H, 3H) bf16, (1, 3H) fp32
    wo_ref, bo_ref,                       # (H, H) bf16, (1, H) fp32
    g1_ref, be1_ref,                      # LayerNorm 1
    w1_ref, b1_ref, w2_ref, b2_ref,       # FFN
    g2_ref, be2_ref,                      # LayerNorm 2
    o_ref,                                # (1, S, H) fp32
):
    _, S, H = x_ref.shape
    dh = H // nh
    b = pl.program_id(0)
    vl = vl_ref[b]                        # scalar SMEM read

    x = x_ref[...].reshape(S, H)          # fp32 residual path (free: drops size-1 dim)
    xb = x.astype(jnp.bfloat16)

    # --- fused Q/K/V projection (1/sqrt(dh) already folded into the Q columns) ---
    qkv = jnp.dot(xb, wqkv_ref[...],
                  preferred_element_type=jnp.float32) + bqkv_ref[...]   # (S, 3H)

    # key-validity mask shared by all heads: (1, S) iota vs. SMEM scalar
    key_pos = jax.lax.broadcasted_iota(jnp.int32, (1, S), 1)
    key_mask = key_pos < vl

    # --- per-head attention; head/QKV selection = 128-lane-aligned static slices ---
    ctx_heads = []
    for h in range(nh):                   # static, unrolled at trace time
        qh = qkv[:, h * dh:(h + 1) * dh].astype(jnp.bfloat16)            # (S, dh)
        kh = qkv[:, H + h * dh:H + (h + 1) * dh].astype(jnp.bfloat16)
        vh = qkv[:, 2 * H + h * dh:2 * H + (h + 1) * dh].astype(jnp.bfloat16)

        s = jnp.einsum('qd,kd->qk', qh, kh,
                       preferred_element_type=jnp.float32)               # (S, S)
        s = jnp.where(key_mask, s, NEG_INF)
        s = s - jnp.max(s, axis=-1, keepdims=True)
        p = jnp.exp(s)
        p = p * pl.reciprocal(jnp.sum(p, axis=-1, keepdims=True), approx=True)

        ctx_heads.append(jnp.dot(p.astype(jnp.bfloat16), vh,
                                 preferred_element_type=jnp.float32))    # (S, dh)

    # lane-concat (128-aligned, head-major == transpose_output order) -> (S, H)
    ctx = jnp.concatenate(ctx_heads, axis=-1)

    # --- output projection: single K = nh*dh contraction on the MXU ---
    attn = jnp.dot(ctx.astype(jnp.bfloat16), wo_ref[...],
                   preferred_element_type=jnp.float32) + bo_ref[...]

    # --- AddNorm 1 (dropout == identity at inference) ---
    y = _layernorm(attn + x, g1_ref[...], be1_ref[...])

    # --- PositionWiseFFN ---
    h1 = jnp.dot(y.astype(jnp.bfloat16), w1_ref[...],
                 preferred_element_type=jnp.float32) + b1_ref[...]
    h1 = jnp.maximum(h1, 0.0)
    ffn = jnp.dot(h1.astype(jnp.bfloat16), w2_ref[...],
                  preferred_element_type=jnp.float32) + b2_ref[...]

    # --- AddNorm 2 ---
    o_ref[...] = _layernorm(ffn + y, g2_ref[...], be2_ref[...]).reshape(1, S, H)


def pack_params(params, num_heads):
    """One-time weight packing (layout + bf16 casts). Keep OUT of the per-call path."""
    H = params["wq"].shape[0]
    dh = H // num_heads
    scale = 1.0 / math.sqrt(dh)
    bf16 = jnp.bfloat16
    return {
        # scale folded into Wq / bq; Q|K|V stacked on the lane axis -> one matmul.
        "wqkv": jnp.concatenate(
            [params["wq"] * scale, params["wk"], params["wv"]], axis=1).astype(bf16),
        "bqkv": jnp.concatenate(
            [params["bq"] * scale, params["bk"], params["bv"]], axis=1
        ).astype(jnp.float32),
        "wo": params["wo"].astype(bf16), "bo": params["bo"].astype(jnp.float32),
        "g1": params["g1"], "be1": params["be1"],
        "w1": params["w1"].astype(bf16), "b1": params["b1"],
        "w2": params["w2"].astype(bf16), "b2": params["b2"],
        "g2": params["g2"], "be2": params["be2"],
    }


@functools.partial(jax.jit, static_argnames=("num_heads",))
def encoder_block(x, valid_lens, packed, *, num_heads):
    """One Transformer encoder block. x: (B,S,H) fp32, valid_lens: (B,) int."""
    B, S, H = x.shape

    kernel = functools.partial(encoder_block_kernel, num_heads)

    weights = [packed["wqkv"], packed["bqkv"], packed["wo"], packed["bo"],
               packed["g1"], packed["be1"],
               packed["w1"], packed["b1"], packed["w2"], packed["b2"],
               packed["g2"], packed["be2"]]

    def const_spec(a):
        # Constant block index across the grid => weights DMA'd once, stay resident.
        nd = a.ndim
        return pl.BlockSpec(a.shape, lambda b, vl, _nd=nd: (0,) * _nd)

    grid_spec = pltpu.PrefetchScalarGridSpec(
        num_scalar_prefetch=1,                 # valid_lens -> SMEM
        grid=(B,),                             # one batch element per step / per TC
        in_specs=[pl.BlockSpec((1, S, H), lambda b, vl: (b, 0, 0))]
                 + [const_spec(a) for a in weights],
        out_specs=pl.BlockSpec((1, S, H), lambda b, vl: (b, 0, 0)),
    )

    return pl.pallas_call(
        kernel,
        out_shape=jax.ShapeDtypeStruct((B, S, H), jnp.float32),
        grid_spec=grid_spec,
        compiler_params=pltpu.CompilerParams(
            dimension_semantics=("parallel",),     # both TCs on v7x; no-op on v5e/v6e
            vmem_limit_bytes=32 * 1024 * 1024),    # tiny working set; safe on all gens
    )(valid_lens.astype(jnp.int32), x.astype(jnp.float32), *weights)


def init_encoder_block_params(key, num_hiddens, ffn_num_hiddens):
    """Deterministic synthetic parameters (shapes match the nn.Module, bias=True)."""
    H, F = num_hiddens, ffn_num_hiddens
    ks = jax.random.split(key, 10)

    def w(k, shape, s=0.02):
        return jax.random.normal(k, shape, jnp.float32) * s

    return {
        "wq": w(ks[0], (H, H)), "bq": w(ks[6], (1, H)),
        "wk": w(ks[1], (H, H)), "bk": w(ks[7], (1, H)),
        "wv": w(ks[2], (H, H)), "bv": w(ks[8], (1, H)),
        "wo": w(ks[3], (H, H)), "bo": w(ks[9], (1, H)),
        "g1": jnp.ones((1, H), jnp.float32), "be1": jnp.zeros((1, H), jnp.float32),
        "w1": w(ks[4], (H, F)), "b1": jnp.zeros((1, F), jnp.float32),
        "w2": w(ks[5], (F, H)), "b2": jnp.zeros((1, H), jnp.float32),
        "g2": jnp.ones((1, H), jnp.float32), "be2": jnp.zeros((1, H), jnp.float32),
    }


def encoder_block_ref(x, valid_lens, params, num_heads):
    """Pure-JAX fp32 reference mirroring the PyTorch EncoderBlock forward."""
    B, S, H = x.shape
    nh = num_heads
    dh = H // nh

    q = x @ params["wq"] + params["bq"]
    k = x @ params["wk"] + params["bk"]
    v = x @ params["wv"] + params["bv"]

    def split(t):                                    # transpose_qkv
        return t.reshape(B, S, nh, dh).transpose(0, 2, 1, 3)

    qh, kh, vh = split(q), split(k), split(v)
    s = jnp.einsum('bhqd,bhkd->bhqk', qh, kh) / math.sqrt(dh)
    mask = jnp.arange(S, dtype=jnp.int32)[None, None, None, :] < \
        valid_lens.astype(jnp.int32)[:, None, None, None]
    s = jnp.where(mask, s, NEG_INF)
    p = jax.nn.softmax(s, axis=-1)
    ctx = jnp.einsum('bhqk,bhkd->bhqd', p, vh)
    ctx = ctx.transpose(0, 2, 1, 3).reshape(B, S, H)  # transpose_output
    attn = ctx @ params["wo"] + params["bo"]

    y = _layernorm(attn + x, params["g1"], params["be1"])
    h1 = jnp.maximum(y @ params["w1"] + params["b1"], 0.0)
    ffn = h1 @ params["w2"] + params["b2"]
    return _layernorm(ffn + y, params["g2"], params["be2"])


if __name__ == "__main__":
    # Small but lane-dense shapes (H, FFN multiples of 128; head dim = 128).
    B, S = 2, 8
    num_hiddens = 256
    ffn_num_hiddens = 512
    num_heads = 2

    key = jax.random.PRNGKey(0)
    pkey, xkey = jax.random.split(key)
    params = init_encoder_block_params(pkey, num_hiddens, ffn_num_hiddens)
    packed = pack_params(params, num_heads)          # one-time packing, outside call path
    x = jax.random.normal(xkey, (B, S, num_hiddens), jnp.float32)
    valid_lens = jnp.array([S, 5], dtype=jnp.int32)

    out = encoder_block(x, valid_lens, packed, num_heads=num_heads)
    out = jax.block_until_ready(out)

    assert out.shape == (B, S, num_hiddens)
    assert bool(jnp.all(jnp.isfinite(out)))

    ref = encoder_block_ref(x, valid_lens, params, num_heads)
    max_err = float(jnp.max(jnp.abs(out - ref)))
    # bf16 matmul inputs + approx reciprocal vs. pure-fp32 reference.
    assert max_err < 0.15, f"kernel/reference mismatch: max abs err = {max_err}"

    print("KERNEL_OK")
</pallas_src>

<mosaic_0001>
module attributes {stable_mosaic.version = 11 : i64} {
  func.func @encoder_block_kernel(%arg0: i32, %arg1: memref<2xi32, #tpu.memory_space<smem>>, %arg2: memref<1x8x256xf32, #tpu.memory_space<vmem>>, %arg3: memref<256x768xbf16, #tpu.memory_space<vmem>>, %arg4: memref<1x768xf32, #tpu.memory_space<vmem>>, %arg5: memref<256x256xbf16, #tpu.memory_space<vmem>>, %arg6: memref<1x256xf32, #tpu.memory_space<vmem>>, %arg7: memref<1x256xf32, #tpu.memory_space<vmem>>, %arg8: memref<1x256xf32, #tpu.memory_space<vmem>>, %arg9: memref<256x512xbf16, #tpu.memory_space<vmem>>, %arg10: memref<1x512xf32, #tpu.memory_space<vmem>>, %arg11: memref<512x256xbf16, #tpu.memory_space<vmem>>, %arg12: memref<1x256xf32, #tpu.memory_space<vmem>>, %arg13: memref<1x256xf32, #tpu.memory_space<vmem>>, %arg14: memref<1x256xf32, #tpu.memory_space<vmem>>, %arg15: memref<1x8x256xf32, #tpu.memory_space<vmem>>) attributes {dimension_semantics = [#tpu.dimension_semantics<parallel>], iteration_bounds = array<i64: 2>, scalar_prefetch = 1 : i64, scratch_operands = 0 : i64, tpu.core_type = #tpu.core_type<tc>, window_params = [{transform_indices = @transform_0, window_bounds = array<i64: 1, 8, 256>}, {pipeline_mode = #tpu.pipeline_mode<synchronous>, transform_indices = @transform_1, window_bounds = array<i64: 256, 768>}, {pipeline_mode = #tpu.pipeline_mode<synchronous>, transform_indices = @transform_2, window_bounds = array<i64: 1, 768>}, {pipeline_mode = #tpu.pipeline_mode<synchronous>, transform_indices = @transform_3, window_bounds = array<i64: 256, 256>}, {pipeline_mode = #tpu.pipeline_mode<synchronous>, transform_indices = @transform_4, window_bounds = array<i64: 1, 256>}, {pipeline_mode = #tpu.pipeline_mode<synchronous>, transform_indices = @transform_5, window_bounds = array<i64: 1, 256>}, {pipeline_mode = #tpu.pipeline_mode<synchronous>, transform_indices = @transform_6, window_bounds = array<i64: 1, 256>}, {pipeline_mode = #tpu.pipeline_mode<synchronous>, transform_indices = @transform_7, window_bounds = array<i64: 256, 512>}, {pipeline_mode = #tpu.pipeline_mode<synchronous>, transform_indices = @transform_8, window_bounds = array<i64: 1, 512>}, {pipeline_mode = #tpu.pipeline_mode<synchronous>, transform_indices = @transform_9, window_bounds = array<i64: 512, 256>}, {pipeline_mode = #tpu.pipeline_mode<synchronous>, transform_indices = @transform_10, window_bounds = array<i64: 1, 256>}, {pipeline_mode = #tpu.pipeline_mode<synchronous>, transform_indices = @transform_11, window_bounds = array<i64: 1, 256>}, {pipeline_mode = #tpu.pipeline_mode<synchronous>, transform_indices = @transform_12, window_bounds = array<i64: 1, 256>}, {transform_indices = @transform_13, window_bounds = array<i64: 1, 8, 256>}]} {
    %0 = arith.index_cast %arg0 : i32 to index
    %1 = memref.load %arg1[%0] : memref<2xi32, #tpu.memory_space<smem>>
    %c0 = arith.constant 0 : index
    %c0_0 = arith.constant 0 : index
    %c0_1 = arith.constant 0 : index
    %2 = vector.load %arg2[%c0, %c0_0, %c0_1] : memref<1x8x256xf32, #tpu.memory_space<vmem>>, vector<1x8x256xf32>
    %3 = vector.shape_cast %2 : vector<1x8x256xf32> to vector<8x256xf32>
    %4 = arith.truncf %3 : vector<8x256xf32> to vector<8x256xbf16>
    %c0_2 = arith.constant 0 : index
    %c0_3 = arith.constant 0 : index
    %5 = vector.load %arg3[%c0_2, %c0_3] : memref<256x768xbf16, #tpu.memory_space<vmem>>, vector<256x768xbf16>
    %cst = arith.constant dense<0.000000e+00> : vector<8x768xf32>
    %6 = tpu.matmul %4, %5, %cst {dimension_numbers = #tpu.dot_dimension_numbers<[1], [0], [0], [1], [0, 0, 1, 1], [], []>} : vector<8x256xbf16>, vector<256x768xbf16>, vector<8x768xf32> -> vector<8x768xf32>
    %c0_4 = arith.constant 0 : index
    %c0_5 = arith.constant 0 : index
    %7 = vector.load %arg4[%c0_4, %c0_5] : memref<1x768xf32, #tpu.memory_space<vmem>>, vector<1x768xf32>
    %8 = vector.broadcast %7 : vector<1x768xf32> to vector<8x768xf32>
    %9 = arith.addf %6, %8 : vector<8x768xf32>
    %10 = tpu.iota {dimensions = array<i32: 1>} : vector<1x8xi32>
    %11 = vector.broadcast %1 : i32 to vector<1x8xi32>
    %12 = arith.cmpi slt, %10, %11 : vector<1x8xi32>
    %13 = vector.extract_strided_slice %9 {offsets = [0, 0], sizes = [8, 128], strides = [1, 1]} : vector<8x768xf32> to vector<8x128xf32>
    %14 = arith.truncf %13 : vector<8x128xf32> to vector<8x128xbf16>
    %15 = vector.extract_strided_slice %9 {offsets = [0, 256], sizes = [8, 128], strides = [1, 1]} : vector<8x768xf32> to vector<8x128xf32>
    %16 = arith.truncf %15 : vector<8x128xf32> to vector<8x128xbf16>
    %17 = vector.extract_strided_slice %9 {offsets = [0, 512], sizes = [8, 128], strides = [1, 1]} : vector<8x768xf32> to vector<8x128xf32>
    %18 = arith.truncf %17 : vector<8x128xf32> to vector<8x128xbf16>
    "tpu.trace_start"() <{level = 10 : i32, message = "qd,kd->qk"}> : () -> ()
    %cst_6 = arith.constant dense<0.000000e+00> : vector<8x8xf32>
    %19 = tpu.matmul %14, %16, %cst_6 {dimension_numbers = #tpu.dot_dimension_numbers<[1], [1], [0], [0], [0, 0, 1, 0], [], []>} : vector<8x128xbf16>, vector<8x128xbf16>, vector<8x8xf32> -> vector<8x8xf32>
    %cst_7 = arith.constant -1.000000e+06 : f32
    "tpu.trace_stop"() : () -> ()
    %20 = vector.shape_cast %12 : vector<1x8xi1> to vector<1x8xi1>
    %21 = vector.broadcast %20 : vector<1x8xi1> to vector<8x8xi1>
    %22 = vector.broadcast %cst_7 : f32 to vector<8x8xf32>
    %23 = arith.select %21, %19, %22 : vector<8x8xi1>, vector<8x8xf32>
    %cst_8 = arith.constant dense<0xFF800000> : vector<8xf32>
    %24 = vector.multi_reduction <maximumf>, %23, %cst_8 [1] : vector<8x8xf32> to vector<8xf32>
    %25 = vector.shape_cast %24 : vector<8xf32> to vector<8x1xf32>
    %26 = vector.broadcast %25 : vector<8x1xf32> to vector<8x8xf32>
    %27 = arith.subf %23, %26 : vector<8x8xf32>
    %28 = math.exp %27 : vector<8x8xf32>
    %cst_9 = arith.constant dense<0.000000e+00> : vector<8xf32>
    %29 = vector.multi_reduction <add>, %28, %cst_9 [1] : vector<8x8xf32> to vector<8xf32>
    %30 = vector.shape_cast %29 : vector<8xf32> to vector<8x1xf32>
    %31 = tpu.reciprocal %30 {approx = true} : vector<8x1xf32> -> vector<8x1xf32>
    %32 = vector.broadcast %31 : vector<8x1xf32> to vector<8x8xf32>
    %33 = arith.mulf %28, %32 : vector<8x8xf32>
    %34 = arith.truncf %33 : vector<8x8xf32> to vector<8x8xbf16>
    %cst_10 = arith.constant dense<0.000000e+00> : vector<8x128xf32>
    %35 = tpu.matmul %34, %18, %cst_10 {dimension_numbers = #tpu.dot_dimension_numbers<[1], [0], [0], [1], [0, 0, 1, 1], [], []>} : vector<8x8xbf16>, vector<8x128xbf16>, vector<8x128xf32> -> vector<8x128xf32>
    %36 = vector.extract_strided_slice %9 {offsets = [0, 128], sizes = [8, 128], strides = [1, 1]} : vector<8x768xf32> to vector<8x128xf32>
    %37 = arith.truncf %36 : vector<8x128xf32> to vector<8x128xbf16>
    %38 = vector.extract_strided_slice %9 {offsets = [0, 384], sizes = [8, 128], strides = [1, 1]} : vector<8x768xf32> to vector<8x128xf32>
    %39 = arith.truncf %38 : vector<8x128xf32> to vector<8x128xbf16>
    %40 = vector.extract_strided_slice %9 {offsets = [0, 640], sizes = [8, 128], strides = [1, 1]} : vector<8x768xf32> to vector<8x128xf32>
    %41 = arith.truncf %40 : vector<8x128xf32> to vector<8x128xbf16>
    "tpu.trace_start"() <{level = 10 : i32, message = "qd,kd->qk"}> : () -> ()
    %cst_11 = arith.constant dense<0.000000e+00> : vector<8x8xf32>
    %42 = tpu.matmul %37, %39, %cst_11 {dimension_numbers = #tpu.dot_dimension_numbers<[1], [1], [0], [0], [0, 0, 1, 0], [], []>} : vector<8x128xbf16>, vector<8x128xbf16>, vector<8x8xf32> -> vector<8x8xf32>
    %cst_12 = arith.constant -1.000000e+06 : f32
    "tpu.trace_stop"() : () -> ()
    %43 = vector.shape_cast %12 : vector<1x8xi1> to vector<1x8xi1>
    %44 = vector.broadcast %43 : vector<1x8xi1> to vector<8x8xi1>
    %45 = vector.broadcast %cst_12 : f32 to vector<8x8xf32>
    %46 = arith.select %44, %42, %45 : vector<8x8xi1>, vector<8x8xf32>
    %cst_13 = arith.constant dense<0xFF800000> : vector<8xf32>
    %47 = vector.multi_reduction <maximumf>, %46, %cst_13 [1] : vector<8x8xf32> to vector<8xf32>
    %48 = vector.shape_cast %47 : vector<8xf32> to vector<8x1xf32>
    %49 = vector.broadcast %48 : vector<8x1xf32> to vector<8x8xf32>
    %50 = arith.subf %46, %49 : vector<8x8xf32>
    %51 = math.exp %50 : vector<8x8xf32>
    %cst_14 = arith.constant dense<0.000000e+00> : vector<8xf32>
    %52 = vector.multi_reduction <add>, %51, %cst_14 [1] : vector<8x8xf32> to vector<8xf32>
    %53 = vector.shape_cast %52 : vector<8xf32> to vector<8x1xf32>
    %54 = tpu.reciprocal %53 {approx = true} : vector<8x1xf32> -> vector<8x1xf32>
    %55 = vector.broadcast %54 : vector<8x1xf32> to vector<8x8xf32>
    %56 = arith.mulf %51, %55 : vector<8x8xf32>
    %57 = arith.truncf %56 : vector<8x8xf32> to vector<8x8xbf16>
    %cst_15 = arith.constant dense<0.000000e+00> : vector<8x128xf32>
    %58 = tpu.matmul %57, %41, %cst_15 {dimension_numbers = #tpu.dot_dimension_numbers<[1], [0], [0], [1], [0, 0, 1, 1], [], []>} : vector<8x8xbf16>, vector<8x128xbf16>, vector<8x128xf32> -> vector<8x128xf32>
    %59 = tpu.concatenate %35, %58 in 1 : vector<8x128xf32>, vector<8x128xf32> -> vector<8x256xf32>
    %60 = arith.truncf %59 : vector<8x256xf32> to vector<8x256xbf16>
    %c0_16 = arith.constant 0 : index
    %c0_17 = arith.constant 0 : index
    %61 = vector.load %arg5[%c0_16, %c0_17] : memref<256x256xbf16, #tpu.memory_space<vmem>>, vector<256x256xbf16>
    %cst_18 = arith.constant dense<0.000000e+00> : vector<8x256xf32>
    %62 = tpu.matmul %60, %61, %cst_18 {dimension_numbers = #tpu.dot_dimension_numbers<[1], [0], [0], [1], [0, 0, 1, 1], [], []>} : vector<8x256xbf16>, vector<256x256xbf16>, vector<8x256xf32> -> vector<8x256xf32>
    %c0_19 = arith.constant 0 : index
    %c0_20 = arith.constant 0 : index
    %63 = vector.load %arg6[%c0_19, %c0_20] : memref<1x256xf32, #tpu.memory_space<vmem>>, vector<1x256xf32>
    %64 = vector.broadcast %63 : vector<1x256xf32> to vector<8x256xf32>
    %65 = arith.addf %62, %64 : vector<8x256xf32>
    %66 = arith.addf %65, %3 : vector<8x256xf32>
    %c0_21 = arith.constant 0 : index
    %c0_22 = arith.constant 0 : index
    %67 = vector.load %arg7[%c0_21, %c0_22] : memref<1x256xf32, #tpu.memory_space<vmem>>, vector<1x256xf32>
    %c0_23 = arith.constant 0 : index
    %c0_24 = arith.constant 0 : index
    %68 = vector.load %arg8[%c0_23, %c0_24] : memref<1x256xf32, #tpu.memory_space<vmem>>, vector<1x256xf32>
    %cst_25 = arith.constant dense<0.000000e+00> : vector<8xf32>
    %69 = vector.multi_reduction <add>, %66, %cst_25 [1] : vector<8x256xf32> to vector<8xf32>
    %70 = vector.shape_cast %69 : vector<8xf32> to vector<8x1xf32>
    %cst_26 = arith.constant 2.560000e+02 : f32
    %71 = vector.broadcast %cst_26 : f32 to vector<8x1xf32>
    %72 = arith.divf %70, %71 : vector<8x1xf32>
    %73 = vector.broadcast %72 : vector<8x1xf32> to vector<8x256xf32>
    %74 = arith.subf %66, %73 : vector<8x256xf32>
    %75 = arith.mulf %74, %74 : vector<8x256xf32>
    %cst_27 = arith.constant dense<0.000000e+00> : vector<8xf32>
    %76 = vector.multi_reduction <add>, %75, %cst_27 [1] : vector<8x256xf32> to vector<8xf32>
    %77 = vector.shape_cast %76 : vector<8xf32> to vector<8x1xf32>
    %cst_28 = arith.constant 2.560000e+02 : f32
    %78 = vector.broadcast %cst_28 : f32 to vector<8x1xf32>
    %79 = arith.divf %77, %78 : vector<8x1xf32>
    %80 = vector.broadcast %72 : vector<8x1xf32> to vector<8x256xf32>
    %81 = arith.subf %66, %80 : vector<8x256xf32>
    %cst_29 = arith.constant 9.99999974E-6 : f32
    %82 = vector.broadcast %cst_29 : f32 to vector<8x1xf32>
    %83 = arith.addf %79, %82 : vector<8x1xf32>
    %84 = math.rsqrt %83 : vector<8x1xf32>
    %85 = vector.broadcast %84 : vector<8x1xf32> to vector<8x256xf32>
    %86 = arith.mulf %81, %85 : vector<8x256xf32>
    %87 = vector.broadcast %67 : vector<1x256xf32> to vector<8x256xf32>
    %88 = arith.mulf %86, %87 : vector<8x256xf32>
    %89 = vector.broadcast %68 : vector<1x256xf32> to vector<8x256xf32>
    %90 = arith.addf %88, %89 : vector<8x256xf32>
    %91 = arith.truncf %90 : vector<8x256xf32> to vector<8x256xbf16>
    %c0_30 = arith.constant 0 : index
    %c0_31 = arith.constant 0 : index
    %92 = vector.load %arg9[%c0_30, %c0_31] : memref<256x512xbf16, #tpu.memory_space<vmem>>, vector<256x512xbf16>
    %cst_32 = arith.constant dense<0.000000e+00> : vector<8x512xf32>
    %93 = tpu.matmul %91, %92, %cst_32 {dimension_numbers = #tpu.dot_dimension_numbers<[1], [0], [0], [1], [0, 0, 1, 1], [], []>} : vector<8x256xbf16>, vector<256x512xbf16>, vector<8x512xf32> -> vector<8x512xf32>
    %c0_33 = arith.constant 0 : index
    %c0_34 = arith.constant 0 : index
    %94 = vector.load %arg10[%c0_33, %c0_34] : memref<1x512xf32, #tpu.memory_space<vmem>>, vector<1x512xf32>
    %95 = vector.broadcast %94 : vector<1x512xf32> to vector<8x512xf32>
    %96 = arith.addf %93, %95 : vector<8x512xf32>
    %cst_35 = arith.constant 0.000000e+00 : f32
    %97 = vector.broadcast %cst_35 : f32 to vector<8x512xf32>
    %98 = arith.maximumf %96, %97 : vector<8x512xf32>
    %99 = arith.truncf %98 : vector<8x512xf32> to vector<8x512xbf16>
    %c0_36 = arith.constant 0 : index
    %c0_37 = arith.constant 0 : index
    %100 = vector.load %arg11[%c0_36, %c0_37] : memref<512x256xbf16, #tpu.memory_space<vmem>>, vector<512x256xbf16>
    %cst_38 = arith.constant dense<0.000000e+00> : vector<8x256xf32>
    %101 = tpu.matmul %99, %100, %cst_38 {dimension_numbers = #tpu.dot_dimension_numbers<[1], [0], [0], [1], [0, 0, 1, 1], [], []>} : vector<8x512xbf16>, vector<512x256xbf16>, vector<8x256xf32> -> vector<8x256xf32>
    %c0_39 = arith.constant 0 : index
    %c0_40 = arith.constant 0 : index
    %102 = vector.load %arg12[%c0_39, %c0_40] : memref<1x256xf32, #tpu.memory_space<vmem>>, vector<1x256xf32>
    %103 = vector.broadcast %102 : vector<1x256xf32> to vector<8x256xf32>
    %104 = arith.addf %101, %103 : vector<8x256xf32>
    %105 = arith.addf %104, %90 : vector<8x256xf32>
    %c0_41 = arith.constant 0 : index
    %c0_42 = arith.constant 0 : index
    %106 = vector.load %arg13[%c0_41, %c0_42] : memref<1x256xf32, #tpu.memory_space<vmem>>, vector<1x256xf32>
    %c0_43 = arith.constant 0 : index
    %c0_44 = arith.constant 0 : index
    %107 = vector.load %arg14[%c0_43, %c0_44] : memref<1x256xf32, #tpu.memory_space<vmem>>, vector<1x256xf32>
    %cst_45 = arith.constant dense<0.000000e+00> : vector<8xf32>
    %108 = vector.multi_reduction <add>, %105, %cst_45 [1] : vector<8x256xf32> to vector<8xf32>
    %109 = vector.shape_cast %108 : vector<8xf32> to vector<8x1xf32>
    %cst_46 = arith.constant 2.560000e+02 : f32
    %110 = vector.broadcast %cst_46 : f32 to vector<8x1xf32>
    %111 = arith.divf %109, %110 : vector<8x1xf32>
    %112 = vector.broadcast %111 : vector<8x1xf32> to vector<8x256xf32>
    %113 = arith.subf %105, %112 : vector<8x256xf32>
    %114 = arith.mulf %113, %113 : vector<8x256xf32>
    %cst_47 = arith.constant dense<0.000000e+00> : vector<8xf32>
    %115 = vector.multi_reduction <add>, %114, %cst_47 [1] : vector<8x256xf32> to vector<8xf32>
    %116 = vector.shape_cast %115 : vector<8xf32> to vector<8x1xf32>
    %cst_48 = arith.constant 2.560000e+02 : f32
    %117 = vector.broadcast %cst_48 : f32 to vector<8x1xf32>
    %118 = arith.divf %116, %117 : vector<8x1xf32>
    %119 = vector.broadcast %111 : vector<8x1xf32> to vector<8x256xf32>
    %120 = arith.subf %105, %119 : vector<8x256xf32>
    %cst_49 = arith.constant 9.99999974E-6 : f32
    %121 = vector.broadcast %cst_49 : f32 to vector<8x1xf32>
    %122 = arith.addf %118, %121 : vector<8x1xf32>
    %123 = math.rsqrt %122 : vector<8x1xf32>
    %124 = vector.broadcast %123 : vector<8x1xf32> to vector<8x256xf32>
    %125 = arith.mulf %120, %124 : vector<8x256xf32>
    %126 = vector.broadcast %106 : vector<1x256xf32> to vector<8x256xf32>
    %127 = arith.mulf %125, %126 : vector<8x256xf32>
    %128 = vector.broadcast %107 : vector<1x256xf32> to vector<8x256xf32>
    %129 = arith.addf %127, %128 : vector<8x256xf32>
    %130 = vector.shape_cast %129 : vector<8x256xf32> to vector<1x8x256xf32>
    %c0_50 = arith.constant 0 : index
    %c0_51 = arith.constant 0 : index
    %c0_52 = arith.constant 0 : index
    %131 = vector.load %arg15[%c0_50, %c0_51, %c0_52] : memref<1x8x256xf32, #tpu.memory_space<vmem>>, vector<1x8x256xf32>
    tpu.vector_store %arg15[%c0_50, %c0_51, %c0_52], %130 {strides = array<i32>} : memref<1x8x256xf32, #tpu.memory_space<vmem>>, vector<1x8x256xf32>,
    return
  }
  func.func @transform_0(%arg0: i32, %arg1: memref<2xi32, #tpu.memory_space<smem>>) -> (i32, i32, i32) {
    %c0_i32 = arith.constant 0 : i32
    %c0_i32_0 = arith.constant 0 : i32
    %c0_i32_1 = arith.constant 0 : i32
    return %arg0, %c0_i32, %c0_i32_0 : i32, i32, i32
  }
  func.func @transform_1(%arg0: i32, %arg1: memref<2xi32, #tpu.memory_space<smem>>) -> (i32, i32) {
    %c0_i32 = arith.constant 0 : i32
    %c0_i32_0 = arith.constant 0 : i32
    %c0_i32_1 = arith.constant 0 : i32
    return %c0_i32, %c0_i32_0 : i32, i32
  }
  func.func @transform_2(%arg0: i32, %arg1: memref<2xi32, #tpu.memory_space<smem>>) -> (i32, i32) {
    %c0_i32 = arith.constant 0 : i32
    %c0_i32_0 = arith.constant 0 : i32
    %c0_i32_1 = arith.constant 0 : i32
    return %c0_i32, %c0_i32_0 : i32, i32
  }
  func.func @transform_3(%arg0: i32, %arg1: memref<2xi32, #tpu.memory_space<smem>>) -> (i32, i32) {
    %c0_i32 = arith.constant 0 : i32
    %c0_i32_0 = arith.constant 0 : i32
    %c0_i32_1 = arith.constant 0 : i32
    return %c0_i32, %c0_i32_0 : i32, i32
  }
  func.func @transform_4(%arg0: i32, %arg1: memref<2xi32, #tpu.memory_space<smem>>) -> (i32, i32) {
    %c0_i32 = arith.constant 0 : i32
    %c0_i32_0 = arith.constant 0 : i32
    %c0_i32_1 = arith.constant 0 : i32
    return %c0_i32, %c0_i32_0 : i32, i32
  }
  func.func @transform_5(%arg0: i32, %arg1: memref<2xi32, #tpu.memory_space<smem>>) -> (i32, i32) {
    %c0_i32 = arith.constant 0 : i32
    %c0_i32_0 = arith.constant 0 : i32
    %c0_i32_1 = arith.constant 0 : i32
    return %c0_i32, %c0_i32_0 : i32, i32
  }
  func.func @transform_6(%arg0: i32, %arg1: memref<2xi32, #tpu.memory_space<smem>>) -> (i32, i32) {
    %c0_i32 = arith.constant 0 : i32
    %c0_i32_0 = arith.constant 0 : i32
    %c0_i32_1 = arith.constant 0 : i32
    return %c0_i32, %c0_i32_0 : i32, i32
  }
  func.func @transform_7(%arg0: i32, %arg1: memref<2xi32, #tpu.memory_space<smem>>) -> (i32, i32) {
    %c0_i32 = arith.constant 0 : i32
    %c0_i32_0 = arith.constant 0 : i32
    %c0_i32_1 = arith.constant 0 : i32
    return %c0_i32, %c0_i32_0 : i32, i32
  }
  func.func @transform_8(%arg0: i32, %arg1: memref<2xi32, #tpu.memory_space<smem>>) -> (i32, i32) {
    %c0_i32 = arith.constant 0 : i32
    %c0_i32_0 = arith.constant 0 : i32
    %c0_i32_1 = arith.constant 0 : i32
    return %c0_i32, %c0_i32_0 : i32, i32
  }
  func.func @transform_9(%arg0: i32, %arg1: memref<2xi32, #tpu.memory_space<smem>>) -> (i32, i32) {
    %c0_i32 = arith.constant 0 : i32
    %c0_i32_0 = arith.constant 0 : i32
    %c0_i32_1 = arith.constant 0 : i32
    return %c0_i32, %c0_i32_0 : i32, i32
  }
  func.func @transform_10(%arg0: i32, %arg1: memref<2xi32, #tpu.memory_space<smem>>) -> (i32, i32) {
    %c0_i32 = arith.constant 0 : i32
    %c0_i32_0 = arith.constant 0 : i32
    %c0_i32_1 = arith.constant 0 : i32
    return %c0_i32, %c0_i32_0 : i32, i32
  }
  func.func @transform_11(%arg0: i32, %arg1: memref<2xi32, #tpu.memory_space<smem>>) -> (i32, i32) {
    %c0_i32 = arith.constant 0 : i32
    %c0_i32_0 = arith.constant 0 : i32
    %c0_i32_1 = arith.constant 0 : i32
    return %c0_i32, %c0_i32_0 : i32, i32
  }
  func.func @transform_12(%arg0: i32, %arg1: memref<2xi32, #tpu.memory_space<smem>>) -> (i32, i32) {
    %c0_i32 = arith.constant 0 : i32
    %c0_i32_0 = arith.constant 0 : i32
    %c0_i32_1 = arith.constant 0 : i32
    return %c0_i32, %c0_i32_0 : i32, i32
  }
  func.func @transform_13(%arg0: i32, %arg1: memref<2xi32, #tpu.memory_space<smem>>) -> (i32, i32, i32) {
    %c0_i32 = arith.constant 0 : i32
    %c0_i32_0 = arith.constant 0 : i32
    %c0_i32_1 = arith.constant 0 : i32
    return %arg0, %c0_i32, %c0_i32_0 : i32, i32, i32
  }
}

</mosaic_0001>

<llo_original>
// kernel: encoder_block.1
$region0: #{encoder_block.1}
  #allocation0 [shape = 'u32[]', space=smem, size = 0x4, offset = 0x4, fixed_abs, tag = 'smem constant byte address 0x4 - core index']
  #allocation1 [shape = 'u32[144,128]{1,0:T(1,128)}', space=vmem, size = 0x12000, scoped, tag = 'internal scratch']
  #allocation2 [shape = 's32[1]{0}', space=sflag, size = 0x4, scoped, tag = 'scoped memory for encoder_block.1']
  #allocation3 [shape = 'u8[512]{0}', space=smem, size = 0x200, scoped, tag = 'prefetched SMEM operand 0']
  %s0 = inlined_call_operand.hbm [shape: s32[2], index: 0, kind: input, shape index: {}]
  %s1 = inlined_call_operand.hbm [shape: f32[2,8,256], index: 1, kind: input, shape index: {}]
  %s2 = inlined_call_operand.hbm [shape: bf16[256,768], index: 2, kind: input, shape index: {}]
  %s3 = inlined_call_operand.vmem [shape: f32[1,768], index: 3, kind: input, shape index: {}]
  %s4 = inlined_call_operand.hbm [shape: bf16[256,256], index: 4, kind: input, shape index: {}]
  %s5 = inlined_call_operand.vmem [shape: f32[1,256], index: 5, kind: input, shape index: {}]
  %s6 = inlined_call_operand.vmem [shape: f32[1,256], index: 6, kind: input, shape index: {}]
  %s7 = inlined_call_operand.hbm [shape: f32[1,256], index: 7, kind: input, shape index: {}]
  %s8 = inlined_call_operand.hbm [shape: bf16[256,512], index: 8, kind: input, shape index: {}]
  %s9 = inlined_call_operand.vmem [shape: f32[1,512], index: 9, kind: input, shape index: {}]
  %s10 = inlined_call_operand.hbm [shape: bf16[512,256], index: 10, kind: input, shape index: {}]
  %s11 = inlined_call_operand.hbm [shape: f32[1,256], index: 11, kind: input, shape index: {}]
  %s12 = inlined_call_operand.vmem [shape: f32[1,256], index: 12, kind: input, shape index: {}]
  %s13 = inlined_call_operand.vmem [shape: f32[1,256], index: 13, kind: input, shape index: {}]
  %s14 = inlined_call_operand.hbm [shape: f32[2,8,256], index: 14, kind: output, shape index: {}]
  %s15 = sld [smem:[#allocation0]]
  $region113: #{encoder_block.1} parent=0
    _
  %s17 = ssub.s32 1, %s15
  %s18 = scalar_select 0, %s17, %s15
  %20 = dma.hbm_to_smem %s0, 16, [#allocation3], [#allocation2]
  %21 = dma.done [#allocation2], 16
  %22 = sfence
  $region1: #{encoder_block.1} parent=0
    #allocation4 [shape = 'u8[16384]{0}', space=vmem, size = 0x4000, scoped, tag = 'input window, operand 1']
    #allocation5 [shape = 's32[2]{0}', space=sflag, size = 0x8, scoped, tag = 'scoped memory for encoder_block.1']
    #allocation6 [shape = 's32[2]{0}', space=sflag, size = 0x8, scoped, tag = 'scoped memory for encoder_block.1']
    #allocation7 [shape = 'u8[393216]{0}', space=vmem, size = 0x60000, scoped, tag = 'input window, operand 2, single buffered']
    #allocation8 [shape = 's32[1]{0}', space=sflag, size = 0x4, scoped, tag = 'scoped memory for encoder_block.1']
    #allocation9 [shape = 'u8[131072]{0}', space=vmem, size = 0x20000, scoped, tag = 'input window, operand 4, single buffered']
    #allocation10 [shape = 'u8[1024]{0}', space=vmem, size = 0x400, scoped, tag = 'input window, operand 7, single buffered']
    #allocation11 [shape = 's32[1]{0}', space=sflag, size = 0x4, scoped, tag = 'scoped memory for encoder_block.1']
    #allocation12 [shape = 'u8[262144]{0}', space=vmem, size = 0x40000, scoped, tag = 'input window, operand 8, single buffered']
    #allocation13 [shape = 'u8[262144]{0}', space=vmem, size = 0x40000, scoped, tag = 'input window, operand 10, single buffered']
    #allocation14 [shape = 's32[1]{0}', space=sflag, size = 0x4, scoped, tag = 'scoped memory for encoder_block.1']
    #allocation15 [shape = 'u8[1024]{0}', space=vmem, size = 0x400, scoped, tag = 'input window, operand 11, single buffered']
    #allocation16 [shape = 'u8[16384]{0}', space=vmem, size = 0x4000, scoped, tag = 'output window, operand 0']
    %23 = vsyncpa [#allocation5], 0
    %s24 = scalar_lea.sflag [#allocation5], 1
    %25 = vsyncpa %s24, 0
    %26 = vsyncpa [#allocation8], 0
    %27 = vsyncpa [#allocation11], 0
    %28 = vsyncpa [#allocation14], 0
    %29 = vsyncpa [#allocation6], 0
    %s30 = scalar_lea.sflag [#allocation6], 1
    %31 = vsyncpa %s30, 0
    loop: start=0, step=1, limit=4
    $region2: #{encoder_block.1} parent=1 // loop_pre_header
      _
    $region3: #{encoder_block.1} parent=1 // loop_header
      %s33 = sphi 0, %s37
      %p34 = scmp.ge.s32.totalorder %s33, 4
      %s43 = sphi 0, %s45
      %s46 = sphi 0, %s43
      %s47 = sphi 0, %s46
      %s63 = sphi 0, %s47
      %s67 = sphi 0, %s67
      %s69 = sphi 0, %s67
      %s70 = sphi 0, %s69
      %s84 = sphi 0, %s70
      %s88 = sphi 0, %s88
      %s90 = sphi 0, %s88
      %s91 = sphi 0, %s90
      %s105 = sphi 0, %s91
      %s109 = sphi 0, %s109
      %s111 = sphi 0, %s109
      %s112 = sphi 0, %s111
      %s126 = sphi 0, %s112
      %s130 = sphi 0, %s130
      %s132 = sphi 0, %s130
      %s133 = sphi 0, %s132
      %s147 = sphi 0, %s133
      %s151 = sphi 0, %s151
      %s153 = sphi 0, %s151
      %s154 = sphi 0, %s153
      %s168 = sphi 0, %s154
      %s172 = sphi 0, %s172
      %s174 = sphi 0, %s172
      %s175 = sphi 0, %s174
      %s189 = sphi 0, %s175
      %s193 = sphi 0, %s193
      %s195 = sphi 0, %s193
      %s196 = sphi 0, %s195
      %s210 = sphi 0, %s196
      %s214 = sphi 0, %s214
      %s216 = sphi 0, %s214
      %s217 = sphi 0, %s216
      %s231 = sphi 0, %s217
      %s235 = sphi 0, %s235
      %s237 = sphi 0, %s235
      %s238 = sphi 0, %s237
      %s252 = sphi 0, %s238
      %s256 = sphi 0, %s256
      %s258 = sphi 0, %s256
      %s259 = sphi 0, %s258
      %s273 = sphi 0, %s259
      %s277 = sphi 0, %s277
      %s279 = sphi 0, %s277
      %s280 = sphi 0, %s279
      %s294 = sphi 0, %s280
      %s298 = sphi 0, %s298
      %s300 = sphi 0, %s298
      %s301 = sphi 0, %s300
      %s315 = sphi 0, %s301
      %s321 = sphi 0, %s323
      %s324 = sphi 0, %s321
      %s325 = sphi 0, %s324
      %s341 = sphi 0, %s325
    $region4: #{encoder_block.1} parent=1 // loop_header_branch
      %36 = sbr.rel (%p34) target = $region8
    $region5: #{encoder_block.1} parent=1 // loop_body
      %s38 = ssub.s32 %s33, 1
      %s39 = ssub.s32 %s33, 2
      %s40 = sadd.s32 %s33, 1
      %s41 = ssub.s32 %s33, %s40
      %p42 = scmp.eq.s32.totalorder %s41, 0
      %s44 = sadd.s32 %s43, 1
      %s45 = scalar_select %p42, %s43, %s44
      %p48 = pneg %p42
      %p49 = scmp.eq.s32.totalorder %s33, 1
      %p50 = por %p48, %p49
      %p51 = scmp.ne.s32.totalorder %s43, %s46
      %p52 = scmp.eq.s32.totalorder %s33, 0
      %p53 = por %p51, %p52
      %p54 = scmp.ne.s32.totalorder %s43, %s46
      %p55 = scmp.eq.s32.totalorder %s38, 1
      %p56 = por %p54, %p55
      %p57 = scmp.ne.s32.totalorder %s46, %s47
      %p58 = scmp.eq.s32.totalorder %s38, 0
      %p59 = por %p57, %p58
      %p60 = scmp.ne.s32.totalorder %s46, %s47
      %p61 = scmp.eq.s32.totalorder %s39, 1
      %p62 = por %p60, %p61
      %p64 = scmp.ne.s32.totalorder %s47, %s63
      %p65 = scmp.eq.s32.totalorder %s39, 0
      %p66 = por %p64, %p65
      %s68 = sadd.s32 %s67, 1
      %p71 = scmp.eq.s32.totalorder %s33, 1
      %p72 = scmp.ne.s32.totalorder %s67, %s69
      %p73 = scmp.eq.s32.totalorder %s33, 0
      %p74 = por %p72, %p73
      %p75 = scmp.ne.s32.totalorder %s67, %s69
      %p76 = scmp.eq.s32.totalorder %s38, 1
      %p77 = por %p75, %p76
      %p78 = scmp.ne.s32.totalorder %s69, %s70
      %p79 = scmp.eq.s32.totalorder %s38, 0
      %p80 = por %p78, %p79
      %p81 = scmp.ne.s32.totalorder %s69, %s70
      %p82 = scmp.eq.s32.totalorder %s39, 1
      %p83 = por %p81, %p82
      %p85 = scmp.ne.s32.totalorder %s70, %s84
      %p86 = scmp.eq.s32.totalorder %s39, 0
      %p87 = por %p85, %p86
      %s89 = sadd.s32 %s88, 1
      %p92 = scmp.eq.s32.totalorder %s33, 1
      %p93 = scmp.ne.s32.totalorder %s88, %s90
      %p94 = scmp.eq.s32.totalorder %s33, 0
      %p95 = por %p93, %p94
      %p96 = scmp.ne.s32.totalorder %s88, %s90
      %p97 = scmp.eq.s32.totalorder %s38, 1
      %p98 = por %p96, %p97
      %p99 = scmp.ne.s32.totalorder %s90, %s91
      %p100 = scmp.eq.s32.totalorder %s38, 0
      %p101 = por %p99, %p100
      %p102 = scmp.ne.s32.totalorder %s90, %s91
      %p103 = scmp.eq.s32.totalorder %s39, 1
      %p104 = por %p102, %p103
      %p106 = scmp.ne.s32.totalorder %s91, %s105
      %p107 = scmp.eq.s32.totalorder %s39, 0
      %p108 = por %p106, %p107
      %s110 = sadd.s32 %s109, 1
      %p113 = scmp.eq.s32.totalorder %s33, 1
      %p114 = scmp.ne.s32.totalorder %s109, %s111
      %p115 = scmp.eq.s32.totalorder %s33, 0
      %p116 = por %p114, %p115
      %p117 = scmp.ne.s32.totalorder %s109, %s111
      %p118 = scmp.eq.s32.totalorder %s38, 1
      %p119 = por %p117, %p118
      %p120 = scmp.ne.s32.totalorder %s111, %s112
      %p121 = scmp.eq.s32.totalorder %s38, 0
      %p122 = por %p120, %p121
      %p123 = scmp.ne.s32.totalorder %s111, %s112
      %p124 = scmp.eq.s32.totalorder %s39, 1
      %p125 = por %p123, %p124
      %p127 = scmp.ne.s32.totalorder %s112, %s126
      %p128 = scmp.eq.s32.totalorder %s39, 0
      %p129 = por %p127, %p128
      %s131 = sadd.s32 %s130, 1
      %p134 = scmp.eq.s32.totalorder %s33, 1
      %p135 = scmp.ne.s32.totalorder %s130, %s132
      %p136 = scmp.eq.s32.totalorder %s33, 0
      %p137 = por %p135, %p136
      %p138 = scmp.ne.s32.totalorder %s130, %s132
      %p139 = scmp.eq.s32.totalorder %s38, 1
      %p140 = por %p138, %p139
      %p141 = scmp.ne.s32.totalorder %s132, %s133
      %p142 = scmp.eq.s32.totalorder %s38, 0
      %p143 = por %p141, %p142
      %p144 = scmp.ne.s32.totalorder %s132, %s133
      %p145 = scmp.eq.s32.totalorder %s39, 1
      %p146 = por %p144, %p145
      %p148 = scmp.ne.s32.totalorder %s133, %s147
      %p149 = scmp.eq.s32.totalorder %s39, 0
      %p150 = por %p148, %p149
      %s152 = sadd.s32 %s151, 1
      %p155 = scmp.eq.s32.totalorder %s33, 1
      %p156 = scmp.ne.s32.totalorder %s151, %s153
      %p157 = scmp.eq.s32.totalorder %s33, 0
      %p158 = por %p156, %p157
      %p159 = scmp.ne.s32.totalorder %s151, %s153
      %p160 = scmp.eq.s32.totalorder %s38, 1
      %p161 = por %p159, %p160
      %p162 = scmp.ne.s32.totalorder %s153, %s154
      %p163 = scmp.eq.s32.totalorder %s38, 0
      %p164 = por %p162, %p163
      %p165 = scmp.ne.s32.totalorder %s153, %s154
      %p166 = scmp.eq.s32.totalorder %s39, 1
      %p167 = por %p165, %p166
      %p169 = scmp.ne.s32.totalorder %s154, %s168
      %p170 = scmp.eq.s32.totalorder %s39, 0
      %p171 = por %p169, %p170
      %s173 = sadd.s32 %s172, 1
      %p176 = scmp.eq.s32.totalorder %s33, 1
      %p177 = scmp.ne.s32.totalorder %s172, %s174
      %p178 = scmp.eq.s32.totalorder %s33, 0
      %p179 = por %p177, %p178
      %p180 = scmp.ne.s32.totalorder %s172, %s174
      %p181 = scmp.eq.s32.totalorder %s38, 1
      %p182 = por %p180, %p181
      %p183 = scmp.ne.s32.totalorder %s174, %s175
      %p184 = scmp.eq.s32.totalorder %s38, 0
      %p185 = por %p183, %p184
      %p186 = scmp.ne.s32.totalorder %s174, %s175
      %p187 = scmp.eq.s32.totalorder %s39, 1
      %p188 = por %p186, %p187
      %p190 = scmp.ne.s32.totalorder %s175, %s189
      %p191 = scmp.eq.s32.totalorder %s39, 0
      %p192 = por %p190, %p191
      %s194 = sadd.s32 %s193, 1
      %p197 = scmp.eq.s32.totalorder %s33, 1
      %p198 = scmp.ne.s32.totalorder %s193, %s195
      %p199 = scmp.eq.s32.totalorder %s33, 0
      %p200 = por %p198, %p199
      %p201 = scmp.ne.s32.totalorder %s193, %s195
      %p202 = scmp.eq.s32.totalorder %s38, 1
      %p203 = por %p201, %p202
      %p204 = scmp.ne.s32.totalorder %s195, %s196
      %p205 = scmp.eq.s32.totalorder %s38, 0
      %p206 = por %p204, %p205
      %p207 = scmp.ne.s32.totalorder %s195, %s196
      %p208 = scmp.eq.s32.totalorder %s39, 1
      %p209 = por %p207, %p208
      %p211 = scmp.ne.s32.totalorder %s196, %s210
      %p212 = scmp.eq.s32.totalorder %s39, 0
      %p213 = por %p211, %p212
      %s215 = sadd.s32 %s214, 1
      %p218 = scmp.eq.s32.totalorder %s33, 1
      %p219 = scmp.ne.s32.totalorder %s214, %s216
      %p220 = scmp.eq.s32.totalorder %s33, 0
      %p221 = por %p219, %p220
      %p222 = scmp.ne.s32.totalorder %s214, %s216
      %p223 = scmp.eq.s32.totalorder %s38, 1
      %p224 = por %p222, %p223
      %p225 = scmp.ne.s32.totalorder %s216, %s217
      %p226 = scmp.eq.s32.totalorder %s38, 0
      %p227 = por %p225, %p226
      %p228 = scmp.ne.s32.totalorder %s216, %s217
      %p229 = scmp.eq.s32.totalorder %s39, 1
      %p230 = por %p228, %p229
      %p232 = scmp.ne.s32.totalorder %s217, %s231
      %p233 = scmp.eq.s32.totalorder %s39, 0
      %p234 = por %p232, %p233
      %s236 = sadd.s32 %s235, 1
      %p239 = scmp.eq.s32.totalorder %s33, 1
      %p240 = scmp.ne.s32.totalorder %s235, %s237
      %p241 = scmp.eq.s32.totalorder %s33, 0
      %p242 = por %p240, %p241
      %p243 = scmp.ne.s32.totalorder %s235, %s237
      %p244 = scmp.eq.s32.totalorder %s38, 1
      %p245 = por %p243, %p244
      %p246 = scmp.ne.s32.totalorder %s237, %s238
      %p247 = scmp.eq.s32.totalorder %s38, 0
      %p248 = por %p246, %p247
      %p249 = scmp.ne.s32.totalorder %s237, %s238
      %p250 = scmp.eq.s32.totalorder %s39, 1
      %p251 = por %p249, %p250
      %p253 = scmp.ne.s32.totalorder %s238, %s252
      %p254 = scmp.eq.s32.totalorder %s39, 0
      %p255 = por %p253, %p254
      %s257 = sadd.s32 %s256, 1
      %p260 = scmp.eq.s32.totalorder %s33, 1
      %p261 = scmp.ne.s32.totalorder %s256, %s258
      %p262 = scmp.eq.s32.totalorder %s33, 0
      %p263 = por %p261, %p262
      %p264 = scmp.ne.s32.totalorder %s256, %s258
      %p265 = scmp.eq.s32.totalorder %s38, 1
      %p266 = por %p264, %p265
      %p267 = scmp.ne.s32.totalorder %s258, %s259
      %p268 = scmp.eq.s32.totalorder %s38, 0
      %p269 = por %p267, %p268
      %p270 = scmp.ne.s32.totalorder %s258, %s259
      %p271 = scmp.eq.s32.totalorder %s39, 1
      %p272 = por %p270, %p271
      %p274 = scmp.ne.s32.totalorder %s259, %s273
      %p275 = scmp.eq.s32.totalorder %s39, 0
      %p276 = por %p274, %p275
      %s278 = sadd.s32 %s277, 1
      %p281 = scmp.eq.s32.totalorder %s33, 1
      %p282 = scmp.ne.s32.totalorder %s277, %s279
      %p283 = scmp.eq.s32.totalorder %s33, 0
      %p284 = por %p282, %p283
      %p285 = scmp.ne.s32.totalorder %s277, %s279
      %p286 = scmp.eq.s32.totalorder %s38, 1
      %p287 = por %p285, %p286
      %p288 = scmp.ne.s32.totalorder %s279, %s280
      %p289 = scmp.eq.s32.totalorder %s38, 0
      %p290 = por %p288, %p289
      %p291 = scmp.ne.s32.totalorder %s279, %s280
      %p292 = scmp.eq.s32.totalorder %s39, 1
      %p293 = por %p291, %p292
      %p295 = scmp.ne.s32.totalorder %s280, %s294
      %p296 = scmp.eq.s32.totalorder %s39, 0
      %p297 = por %p295, %p296
      %s299 = sadd.s32 %s298, 1
      %p302 = scmp.eq.s32.totalorder %s33, 1
      %p303 = scmp.ne.s32.totalorder %s298, %s300
      %p304 = scmp.eq.s32.totalorder %s33, 0
      %p305 = por %p303, %p304
      %p306 = scmp.ne.s32.totalorder %s298, %s300
      %p307 = scmp.eq.s32.totalorder %s38, 1
      %p308 = por %p306, %p307
      %p309 = scmp.ne.s32.totalorder %s300, %s301
      %p310 = scmp.eq.s32.totalorder %s38, 0
      %p311 = por %p309, %p310
      %p312 = scmp.ne.s32.totalorder %s300, %s301
      %p313 = scmp.eq.s32.totalorder %s39, 1
      %p314 = por %p312, %p313
      %p316 = scmp.ne.s32.totalorder %s301, %s315
      %p317 = scmp.eq.s32.totalorder %s39, 0
      %p318 = por %p316, %p317
      %s319 = ssub.s32 %s33, %s40
      %p320 = scmp.eq.s32.totalorder %s319, 0
      %s322 = sadd.s32 %s321, 1
      %s323 = scalar_select %p320, %s321, %s322
      %p326 = pneg %p320
      %p327 = scmp.eq.s32.totalorder %s33, 1
      %p328 = por %p326, %p327
      %p329 = scmp.ne.s32.totalorder %s321, %s324
      %p330 = scmp.eq.s32.totalorder %s33, 0
      %p331 = por %p329, %p330
      %p332 = scmp.ne.s32.totalorder %s321, %s324
      %p333 = scmp.eq.s32.totalorder %s38, 1
      %p334 = por %p332, %p333
      %p335 = scmp.ne.s32.totalorder %s324, %s325
      %p336 = scmp.eq.s32.totalorder %s38, 0
      %p337 = por %p335, %p336
      %p338 = scmp.ne.s32.totalorder %s324, %s325
      %p339 = scmp.eq.s32.totalorder %s39, 1
      %p340 = por %p338, %p339
      %p342 = scmp.ne.s32.totalorder %s325, %s341
      %p343 = scmp.eq.s32.totalorder %s39, 0
      %p344 = por %p342, %p343
      %p345 = scmp.le.s32.totalorder 1, %s33
      %p346 = scmp.lt.s32.totalorder %s33, 3
      %p347 = pnand %p345, %p346
      %p348 = pneg %p347
      // Predicated region
      $region9: #{encoder_block.1} parent=5 // pred_check
        _
      $region10: #{encoder_block.1} parent=5 // pred_check_branch
        %350 = sbr.rel (%p347) target = $region12
      $region11: #{encoder_block.1} parent=5 // pred_region
        %s351 = ssub.s32 %s33, 1
        // Predicated region
        $region13: #{encoder_block.1} parent=11 // pred_check
          %p352 = pneg %p80
        $region14: #{encoder_block.1} parent=11 // pred_check_branch
          %354 = sbr.rel (%p352) target = $region16
        $region15: #{encoder_block.1} parent=11 // pred_region
          %s356 = ssub.s32 12288, 12288
          %357 = vsyncadd [#allocation8], %s356
          %s358 = sshll.u32 [#allocation7], 4
          %s359 = int_to_ptr.vmem [resolvable:$true] %s358
          %364 = dma.hbm_to_vmem [thread:$0]  %s2, 12288, %s359, [#allocation8], 384, 384, 24
        $region16: #{encoder_block.1} parent=11 // pred_fallthru
          _
        // Predicated region
        $region17: #{encoder_block.1} parent=11 // pred_check
          %p365 = pneg %p101
        $region18: #{encoder_block.1} parent=11 // pred_check_branch
          %367 = sbr.rel (%p365) target = $region20
        $region19: #{encoder_block.1} parent=11 // pred_region
          _
        $region20: #{encoder_block.1} parent=11 // pred_fallthru
          _
        // Predicated region
        $region21: #{encoder_block.1} parent=11 // pred_check
          %p368 = pneg %p122
        $region22: #{encoder_block.1} parent=11 // pred_check_branch
          %370 = sbr.rel (%p368) target = $region24
        $region23: #{encoder_block.1} parent=11 // pred_region
          %s372 = ssub.s32 4096, 4096
          %373 = vsyncadd [#allocation8], %s372
          %s374 = sshll.u32 [#allocation9], 4
          %s375 = int_to_ptr.vmem [resolvable:$true] %s374
          %380 = dma.hbm_to_vmem [thread:$0]  %s4, 4096, %s375, [#allocation8], 128, 128, 8
        $region24: #{encoder_block.1} parent=11 // pred_fallthru
          _
        // Predicated region
        $region25: #{encoder_block.1} parent=11 // pred_check
          %p381 = pneg %p143
        $region26: #{encoder_block.1} parent=11 // pred_check_branch
          %383 = sbr.rel (%p381) target = $region28
        $region27: #{encoder_block.1} parent=11 // pred_region
          _
        $region28: #{encoder_block.1} parent=11 // pred_fallthru
          _
        // Predicated region
        $region29: #{encoder_block.1} parent=11 // pred_check
          %p384 = pneg %p164
        $region30: #{encoder_block.1} parent=11 // pred_check_branch
          %386 = sbr.rel (%p384) target = $region32
        $region31: #{encoder_block.1} parent=11 // pred_region
          _
        $region32: #{encoder_block.1} parent=11 // pred_fallthru
          _
        // Predicated region
        $region33: #{encoder_block.1} parent=11 // pred_check
          %p387 = pneg %p185
        $region34: #{encoder_block.1} parent=11 // pred_check_branch
          %389 = sbr.rel (%p387) target = $region36
        $region35: #{encoder_block.1} parent=11 // pred_region
          %s391 = ssub.s32 32, 32
          %392 = vsyncadd [#allocation11], %s391
          %s394 = sshll.u32 [#allocation10], 4
          %s395 = int_to_ptr.vmem [resolvable:$true] %s394
          %397 = dma.hbm_to_vmem [thread:$0]  %s7, 32, %s395, [#allocation11]
        $region36: #{encoder_block.1} parent=11 // pred_fallthru
          _
        // Predicated region
        $region37: #{encoder_block.1} parent=11 // pred_check
          %p398 = pneg %p206
        $region38: #{encoder_block.1} parent=11 // pred_check_branch
          %400 = sbr.rel (%p398) target = $region40
        $region39: #{encoder_block.1} parent=11 // pred_region
          %s402 = ssub.s32 8192, 8192
          %403 = vsyncadd [#allocation11], %s402
          %s404 = sshll.u32 [#allocation12], 4
          %s405 = int_to_ptr.vmem [resolvable:$true] %s404
          %410 = dma.hbm_to_vmem [thread:$0]  %s8, 8192, %s405, [#allocation11], 256, 256, 16
        $region40: #{encoder_block.1} parent=11 // pred_fallthru
          _
        // Predicated region
        $region41: #{encoder_block.1} parent=11 // pred_check
          %p411 = pneg %p227
        $region42: #{encoder_block.1} parent=11 // pred_check_branch
          %413 = sbr.rel (%p411) target = $region44
        $region43: #{encoder_block.1} parent=11 // pred_region
          _
        $region44: #{encoder_block.1} parent=11 // pred_fallthru
          _
        // Predicated region
        $region45: #{encoder_block.1} parent=11 // pred_check
          %p414 = pneg %p248
        $region46: #{encoder_block.1} parent=11 // pred_check_branch
          %416 = sbr.rel (%p414) target = $region48
        $region47: #{encoder_block.1} parent=11 // pred_region
          %s418 = ssub.s32 8192, 8192
          %419 = vsyncadd [#allocation14], %s418
          %s420 = sshll.u32 [#allocation13], 4
          %s421 = int_to_ptr.vmem [resolvable:$true] %s420
          %426 = dma.hbm_to_vmem [thread:$0]  %s10, 8192, %s421, [#allocation14], 128, 128, 8
        $region48: #{encoder_block.1} parent=11 // pred_fallthru
          _
        // Predicated region
        $region49: #{encoder_block.1} parent=11 // pred_check
          %p427 = pneg %p269
        $region50: #{encoder_block.1} parent=11 // pred_check_branch
          %429 = sbr.rel (%p427) target = $region52
        $region51: #{encoder_block.1} parent=11 // pred_region
          %s431 = ssub.s32 32, 32
          %432 = vsyncadd [#allocation14], %s431
          %s434 = sshll.u32 [#allocation15], 4
          %s435 = int_to_ptr.vmem [resolvable:$true] %s434
          %437 = dma.hbm_to_vmem [thread:$0]  %s11, 32, %s435, [#allocation14]
        $region52: #{encoder_block.1} parent=11 // pred_fallthru
          _
        // Predicated region
        $region53: #{encoder_block.1} parent=11 // pred_check
          %p438 = pneg %p290
        $region54: #{encoder_block.1} parent=11 // pred_check_branch
          %440 = sbr.rel (%p438) target = $region56
        $region55: #{encoder_block.1} parent=11 // pred_region
          _
        $region56: #{encoder_block.1} parent=11 // pred_fallthru
          _
        // Predicated region
        $region57: #{encoder_block.1} parent=11 // pred_check
          %p441 = pneg %p311
        $region58: #{encoder_block.1} parent=11 // pred_check_branch
          %443 = sbr.rel (%p441) target = $region60
        $region59: #{encoder_block.1} parent=11 // pred_region
          _
        $region60: #{encoder_block.1} parent=11 // pred_fallthru
          _
      $region12: #{encoder_block.1} parent=5 // pred_fallthru
        _
      %p444 = scmp.lt.s32.totalorder %s33, 2
      // Predicated region
      $region61: #{encoder_block.1} parent=5 // pred_check
        %p445 = pneg %p444
      $region62: #{encoder_block.1} parent=5 // pred_check_branch
        %447 = sbr.rel (%p445) target = $region64
      $region63: #{encoder_block.1} parent=5 // pred_region
        // Predicated region
        $region65: #{encoder_block.1} parent=63 // pred_check
          %p448 = pneg %p53
        $region66: #{encoder_block.1} parent=63 // pred_check_branch
          %450 = sbr.rel (%p448) target = $region68
        $region67: #{encoder_block.1} parent=63 // pred_region
          %s451 = sand.u32 %s43, 1
          %s452 = scalar_lea.sflag [#allocation5], %s451
          %s453 = sand.u32 %s43, 1
          %s454 = smul.addr %s453, 16
          %s455 = scalar_lea.vmem [#allocation4], %s454
          %s457 = ssub.s32 256, 256
          %458 = vsyncadd %s452, %s457
          %s459 = smul.addr %s33, 2
          %s460 = smul.addr %s459, 128
          %s461 = scalar_lea.hbm %s1, %s460
          %s463 = sshll.u32 %s455, 4
          %s464 = int_to_ptr.vmem [resolvable:$true] %s463
          %466 = dma.hbm_to_vmem [thread:$0]  %s461, 256, %s464, %s452
        $region68: #{encoder_block.1} parent=63 // pred_fallthru
          _
      $region64: #{encoder_block.1} parent=5 // pred_fallthru
        _
      %p467 = scmp.le.s32.totalorder 1, %s33
      %p468 = scmp.lt.s32.totalorder %s33, 3
      %p469 = pnand %p467, %p468
      %p470 = pneg %p469
      // Predicated region
      $region69: #{encoder_block.1} parent=5 // pred_check
        _
      $region70: #{encoder_block.1} parent=5 // pred_check_branch
        %472 = sbr.rel (%p469) target = $region72
      $region71: #{encoder_block.1} parent=5 // pred_region
        %s473 = ssub.s32 %s33, 1
        %s474 = sand.u32 %s46, 1
        %s475 = scalar_lea.sflag [#allocation5], %s474
        %s476 = sand.u32 %s46, 1
        %s477 = smul.addr %s476, 16
        %s478 = scalar_lea.vmem [#allocation4], %s477
        // Predicated region
        $region73: #{encoder_block.1} parent=71 // pred_check
          %p479 = pneg %p59
        $region74: #{encoder_block.1} parent=71 // pred_check_branch
          %481 = sbr.rel (%p479) target = $region76
        $region75: #{encoder_block.1} parent=71 // pred_region
          %482 = dma.done %s475, 256
        $region76: #{encoder_block.1} parent=71 // pred_fallthru
          _
        // Predicated region
        $region77: #{encoder_block.1} parent=71 // pred_check
          %p483 = pneg %p80
        $region78: #{encoder_block.1} parent=71 // pred_check_branch
          %485 = sbr.rel (%p483) target = $region80
        $region79: #{encoder_block.1} parent=71 // pred_region
          %486 = dma.done [#allocation8], 12288
        $region80: #{encoder_block.1} parent=71 // pred_fallthru
          _
        // Predicated region
        $region81: #{encoder_block.1} parent=71 // pred_check
          %p487 = pneg %p122
        $region82: #{encoder_block.1} parent=71 // pred_check_branch
          %489 = sbr.rel (%p487) target = $region84
        $region83: #{encoder_block.1} parent=71 // pred_region
          %490 = dma.done [#allocation8], 4096
        $region84: #{encoder_block.1} parent=71 // pred_fallthru
          _
        // Predicated region
        $region85: #{encoder_block.1} parent=71 // pred_check
          %p491 = pneg %p185
        $region86: #{encoder_block.1} parent=71 // pred_check_branch
          %493 = sbr.rel (%p491) target = $region88
        $region87: #{encoder_block.1} parent=71 // pred_region
          %494 = dma.done [#allocation11], 32
        $region88: #{encoder_block.1} parent=71 // pred_fallthru
          _
        // Predicated region
        $region89: #{encoder_block.1} parent=71 // pred_check
          %p495 = pneg %p206
        $region90: #{encoder_block.1} parent=71 // pred_check_branch
          %497 = sbr.rel (%p495) target = $region92
        $region91: #{encoder_block.1} parent=71 // pred_region
          %498 = dma.done [#allocation11], 8192
        $region92: #{encoder_block.1} parent=71 // pred_fallthru
          _
        // Predicated region
        $region93: #{encoder_block.1} parent=71 // pred_check
          %p499 = pneg %p248
        $region94: #{encoder_block.1} parent=71 // pred_check_branch
          %501 = sbr.rel (%p499) target = $region96
        $region95: #{encoder_block.1} parent=71 // pred_region
          %502 = dma.done [#allocation14], 8192
        $region96: #{encoder_block.1} parent=71 // pred_fallthru
          _
        // Predicated region
        $region97: #{encoder_block.1} parent=71 // pred_check
          %p503 = pneg %p269
        $region98: #{encoder_block.1} parent=71 // pred_check_branch
          %505 = sbr.rel (%p503) target = $region100
        $region99: #{encoder_block.1} parent=71 // pred_region
          %506 = dma.done [#allocation14], 32
        $region100: #{encoder_block.1} parent=71 // pred_fallthru
          _
        %s507 = sand.u32 %s46, 1
        %s508 = scalar_lea.sflag [#allocation5], %s507
        %s509 = sand.u32 %s46, 1
        %s510 = smul.addr %s509, 16
        %s511 = scalar_lea.vmem [#allocation4], %s510
        %p512 = pneg %p59
        %p513 = pneg %p56
        %p514 = pneg %p80
        %p515 = pneg %p77
        %p516 = pneg %p101
        %p517 = pneg %p98
        %p518 = pneg %p122
        %p519 = pneg %p119
        %p520 = pneg %p143
        %p521 = pneg %p140
        %p522 = pneg %p164
        %p523 = pneg %p161
        %p524 = pneg %p185
        %p525 = pneg %p182
        %p526 = pneg %p206
        %p527 = pneg %p203
        %p528 = pneg %p227
        %p529 = pneg %p224
        %p530 = pneg %p248
        %p531 = pneg %p245
        %p532 = pneg %p269
        %p533 = pneg %p266
        %p534 = pneg %p290
        %p535 = pneg %p287
        %p536 = pneg %p311
        %p537 = pneg %p308
        %p538 = pneg %p337
        %p539 = pneg %p334
        %s540 = sand.u32 %s324, 1
        %s541 = scalar_lea.sflag [#allocation6], %s540
        %s542 = sand.u32 %s324, 1
        %s543 = smul.addr %s542, 16
        %s544 = scalar_lea.vmem [#allocation16], %s543
        %s546 = sld [smem:[#allocation3 + %s38]]
        %v547 = vld [vmem:[%s478] sm:$0xff]
        %v548 = vld [vmem:[%s478 + $0x8] sm:$0xff]
        %v549 = vpack.c.bf16 %v547, %v547
        %v550 = vpack.c.bf16 %v548, %v548
        %v551 = vld [vmem:[#allocation7] sm:$0xff]
        %v552 = vld [vmem:[#allocation7 + $0x8] sm:$0xff]
        %v553 = vld [vmem:[#allocation7 + $0x10] sm:$0xff]
        %v554 = vld [vmem:[#allocation7 + $0x18] sm:$0xff]
        %v555 = vld [vmem:[#allocation7 + $0x20] sm:$0xff]
        %v556 = vld [vmem:[#allocation7 + $0x28] sm:$0xff]
        %v557 = vld [vmem:[#allocation7 + $0x30] sm:$0xff]
        %v558 = vld [vmem:[#allocation7 + $0x38] sm:$0xff]
        %v559 = vld [vmem:[#allocation7 + $0x40] sm:$0xff]
        %v560 = vld [vmem:[#allocation7 + $0x48] sm:$0xff]
        %v561 = vld [vmem:[#allocation7 + $0x50] sm:$0xff]
        %v562 = vld [vmem:[#allocation7 + $0x58] sm:$0xff]
        %v563 = vld [vmem:[#allocation7 + $0x60] sm:$0xff]
        %v564 = vld [vmem:[#allocation7 + $0x68] sm:$0xff]
        %v565 = vld [vmem:[#allocation7 + $0x70] sm:$0xff]
        %v566 = vld [vmem:[#allocation7 + $0x78] sm:$0xff]
        %v567 = vld [vmem:[#allocation7 + $0x80] sm:$0xff]
        %v568 = vld [vmem:[#allocation7 + $0x88] sm:$0xff]
        %v569 = vld [vmem:[#allocation7 + $0x90] sm:$0xff]
        %v570 = vld [vmem:[#allocation7 + $0x98] sm:$0xff]
        %v571 = vld [vmem:[#allocation7 + $0xa0] sm:$0xff]
        %v572 = vld [vmem:[#allocation7 + $0xa8] sm:$0xff]
        %v573 = vld [vmem:[#allocation7 + $0xb0] sm:$0xff]
        %v574 = vld [vmem:[#allocation7 + $0xb8] sm:$0xff]
        %v575 = vld [vmem:[#allocation7 + $0xc0] sm:$0xff]
        %v576 = vld [vmem:[#allocation7 + $0xc8] sm:$0xff]
        %v577 = vld [vmem:[#allocation7 + $0xd0] sm:$0xff]
        %v578 = vld [vmem:[#allocation7 + $0xd8] sm:$0xff]
        %v579 = vld [vmem:[#allocation7 + $0xe0] sm:$0xff]
        %v580 = vld [vmem:[#allocation7 + $0xe8] sm:$0xff]
        %v581 = vld [vmem:[#allocation7 + $0xf0] sm:$0xff]
        %v582 = vld [vmem:[#allocation7 + $0xf8] sm:$0xff]
        %v583 = vld [vmem:[#allocation7 + $0x100] sm:$0xff]
        %v584 = vld [vmem:[#allocation7 + $0x108] sm:$0xff]
        %v585 = vld [vmem:[#allocation7 + $0x110] sm:$0xff]
        %v586 = vld [vmem:[#allocation7 + $0x118] sm:$0xff]
        %v587 = vld [vmem:[#allocation7 + $0x120] sm:$0xff]
        %v588 = vld [vmem:[#allocation7 + $0x128] sm:$0xff]
        %v589 = vld [vmem:[#allocation7 + $0x130] sm:$0xff]
        %v590 = vld [vmem:[#allocation7 + $0x138] sm:$0xff]
        %v591 = vld [vmem:[#allocation7 + $0x140] sm:$0xff]
        %v592 = vld [vmem:[#allocation7 + $0x148] sm:$0xff]
        %v593 = vld [vmem:[#allocation7 + $0x150] sm:$0xff]
        %v594 = vld [vmem:[#allocation7 + $0x158] sm:$0xff]
        %v595 = vld [vmem:[#allocation7 + $0x160] sm:$0xff]
        %v596 = vld [vmem:[#allocation7 + $0x168] sm:$0xff]
        %v597 = vld [vmem:[#allocation7 + $0x170] sm:$0xff]
        %v598 = vld [vmem:[#allocation7 + $0x178] sm:$0xff]
        %v599 = vld [vmem:[#allocation7 + $0x180] sm:$0xff]
        %v600 = vld [vmem:[#allocation7 + $0x188] sm:$0xff]
        %v601 = vld [vmem:[#allocation7 + $0x190] sm:$0xff]
        %v602 = vld [vmem:[#allocation7 + $0x198] sm:$0xff]
        %v603 = vld [vmem:[#allocation7 + $0x1a0] sm:$0xff]
        %v604 = vld [vmem:[#allocation7 + $0x1a8] sm:$0xff]
        %v605 = vld [vmem:[#allocation7 + $0x1b0] sm:$0xff]
        %v606 = vld [vmem:[#allocation7 + $0x1b8] sm:$0xff]
        %v607 = vld [vmem:[#allocation7 + $0x1c0] sm:$0xff]
        %v608 = vld [vmem:[#allocation7 + $0x1c8] sm:$0xff]
        %v609 = vld [vmem:[#allocation7 + $0x1d0] sm:$0xff]
        %v610 = vld [vmem:[#allocation7 + $0x1d8] sm:$0xff]
        %v611 = vld [vmem:[#allocation7 + $0x1e0] sm:$0xff]
        %v612 = vld [vmem:[#allocation7 + $0x1e8] sm:$0xff]
        %v613 = vld [vmem:[#allocation7 + $0x1f0] sm:$0xff]
        %v614 = vld [vmem:[#allocation7 + $0x1f8] sm:$0xff]
        %v615 = vld [vmem:[#allocation7 + $0x200] sm:$0xff]
        %v616 = vld [vmem:[#allocation7 + $0x208] sm:$0xff]
        %v617 = vld [vmem:[#allocation7 + $0x210] sm:$0xff]
        %v618 = vld [vmem:[#allocation7 + $0x218] sm:$0xff]
        %v619 = vld [vmem:[#allocation7 + $0x220] sm:$0xff]
        %v620 = vld [vmem:[#allocation7 + $0x228] sm:$0xff]
        %v621 = vld [vmem:[#allocation7 + $0x230] sm:$0xff]
        %v622 = vld [vmem:[#allocation7 + $0x238] sm:$0xff]
        %v623 = vld [vmem:[#allocation7 + $0x240] sm:$0xff]
        %v624 = vld [vmem:[#allocation7 + $0x248] sm:$0xff]
        %v625 = vld [vmem:[#allocation7 + $0x250] sm:$0xff]
        %v626 = vld [vmem:[#allocation7 + $0x258] sm:$0xff]
        %v627 = vld [vmem:[#allocation7 + $0x260] sm:$0xff]
        %v628 = vld [vmem:[#allocation7 + $0x268] sm:$0xff]
        %v629 = vld [vmem:[#allocation7 + $0x270] sm:$0xff]
        %v630 = vld [vmem:[#allocation7 + $0x278] sm:$0xff]
        %v631 = vld [vmem:[#allocation7 + $0x280] sm:$0xff]
        %v632 = vld [vmem:[#allocation7 + $0x288] sm:$0xff]
        %v633 = vld [vmem:[#allocation7 + $0x290] sm:$0xff]
        %v634 = vld [vmem:[#allocation7 + $0x298] sm:$0xff]
        %v635 = vld [vmem:[#allocation7 + $0x2a0] sm:$0xff]
        %v636 = vld [vmem:[#allocation7 + $0x2a8] sm:$0xff]
        %v637 = vld [vmem:[#allocation7 + $0x2b0] sm:$0xff]
        %v638 = vld [vmem:[#allocation7 + $0x2b8] sm:$0xff]
        %v639 = vld [vmem:[#allocation7 + $0x2c0] sm:$0xff]
        %v640 = vld [vmem:[#allocation7 + $0x2c8] sm:$0xff]
        %v641 = vld [vmem:[#allocation7 + $0x2d0] sm:$0xff]
        %v642 = vld [vmem:[#allocation7 + $0x2d8] sm:$0xff]
        %v643 = vld [vmem:[#allocation7 + $0x2e0] sm:$0xff]
        %v644 = vld [vmem:[#allocation7 + $0x2e8] sm:$0xff]
        %v645 = vld [vmem:[#allocation7 + $0x2f0] sm:$0xff]
        %v646 = vld [vmem:[#allocation7 + $0x2f8] sm:$0xff]
        %v647 = vld [vmem:[%s3] sm:$0x3f]
        %v649 = vlaneseq
        %v650 = vshrl.u32 %v649, 7
        %v651 = vsub.s32 0, %v650
        %v652 = vrot.slane %v647, %v651
        %v653 = vlaneseq
        %v654 = vshrl.u32 %v653, 7
        %v655 = vsub.s32 1, %v654
        %v656 = vrot.slane %v647, %v655
        %v657 = vlaneseq
        %v658 = vshrl.u32 %v657, 7
        %v659 = vsub.s32 2, %v658
        %v660 = vrot.slane %v647, %v659
        %v661 = vlaneseq
        %v662 = vshrl.u32 %v661, 7
        %v663 = vsub.s32 3, %v662
        %v664 = vrot.slane %v647, %v663
        %v665 = vlaneseq
        %v666 = vshrl.u32 %v665, 7
        %v667 = vsub.s32 4, %v666
        %v668 = vrot.slane %v647, %v667
        %v669 = vlaneseq
        %v670 = vshrl.u32 %v669, 7
        %v671 = vsub.s32 5, %v670
        %v672 = vrot.slane %v647, %v671
        %v775 = vunpack.c.l.b16 %v551
        %v776 = vunpack.c.h.b16 %v551
        %v777 = vunpack.c.l.b16 %v552
        %v778 = vunpack.c.h.b16 %v552
        %v779 = vunpack.c.l.b16 %v553
        %v780 = vunpack.c.h.b16 %v553
        %v781 = vunpack.c.l.b16 %v554
        %v782 = vunpack.c.h.b16 %v554
        %v783 = vunpack.c.l.b16 %v555
        %v784 = vunpack.c.h.b16 %v555
        %v785 = vunpack.c.l.b16 %v556
        %v786 = vunpack.c.h.b16 %v556
        %v787 = vunpack.c.l.b16 %v557
        %v788 = vunpack.c.h.b16 %v557
        %v789 = vunpack.c.l.b16 %v558
        %v790 = vunpack.c.h.b16 %v558
        %v791 = vunpack.c.l.b16 %v559
        %v792 = vunpack.c.h.b16 %v559
        %v793 = vunpack.c.l.b16 %v560
        %v794 = vunpack.c.h.b16 %v560
        %v795 = vunpack.c.l.b16 %v561
        %v796 = vunpack.c.h.b16 %v561
        %v797 = vunpack.c.l.b16 %v562
        %v798 = vunpack.c.h.b16 %v562
        %v799 = vunpack.c.l.b16 %v563
        %v800 = vunpack.c.h.b16 %v563
        %v801 = vunpack.c.l.b16 %v564
        %v802 = vunpack.c.h.b16 %v564
        %v803 = vunpack.c.l.b16 %v565
        %v804 = vunpack.c.h.b16 %v565
        %v805 = vunpack.c.l.b16 %v566
        %v806 = vunpack.c.h.b16 %v566
        %v807 = vunpack.c.l.b16 %v567
        %v808 = vunpack.c.h.b16 %v567
        %v809 = vunpack.c.l.b16 %v568
        %v810 = vunpack.c.h.b16 %v568
        %v811 = vunpack.c.l.b16 %v569
        %v812 = vunpack.c.h.b16 %v569
        %v813 = vunpack.c.l.b16 %v570
        %v814 = vunpack.c.h.b16 %v570
        %v815 = vunpack.c.l.b16 %v571
        %v816 = vunpack.c.h.b16 %v571
        %v817 = vunpack.c.l.b16 %v572
        %v818 = vunpack.c.h.b16 %v572
        %v819 = vunpack.c.l.b16 %v573
        %v820 = vunpack.c.h.b16 %v573
        %v821 = vunpack.c.l.b16 %v574
        %v822 = vunpack.c.h.b16 %v574
        %v823 = vunpack.c.l.b16 %v575
        %v824 = vunpack.c.h.b16 %v575
        %v825 = vunpack.c.l.b16 %v576
        %v826 = vunpack.c.h.b16 %v576
        %v827 = vunpack.c.l.b16 %v577
        %v828 = vunpack.c.h.b16 %v577
        %v829 = vunpack.c.l.b16 %v578
        %v830 = vunpack.c.h.b16 %v578
        %v831 = vunpack.c.l.b16 %v579
        %v832 = vunpack.c.h.b16 %v579
        %v833 = vunpack.c.l.b16 %v580
        %v834 = vunpack.c.h.b16 %v580
        %v835 = vunpack.c.l.b16 %v581
        %v836 = vunpack.c.h.b16 %v581
        %v837 = vunpack.c.l.b16 %v582
        %v838 = vunpack.c.h.b16 %v582
        %v839 = vunpack.c.l.b16 %v583
        %v840 = vunpack.c.h.b16 %v583
        %v841 = vunpack.c.l.b16 %v584
        %v842 = vunpack.c.h.b16 %v584
        %v843 = vunpack.c.l.b16 %v585
        %v844 = vunpack.c.h.b16 %v585
        %v845 = vunpack.c.l.b16 %v586
        %v846 = vunpack.c.h.b16 %v586
        %v847 = vunpack.c.l.b16 %v587
        %v848 = vunpack.c.h.b16 %v587
        %v849 = vunpack.c.l.b16 %v588
        %v850 = vunpack.c.h.b16 %v588
        %v851 = vunpack.c.l.b16 %v589
        %v852 = vunpack.c.h.b16 %v589
        %v853 = vunpack.c.l.b16 %v590
        %v854 = vunpack.c.h.b16 %v590
        %v855 = vunpack.c.l.b16 %v591
        %v856 = vunpack.c.h.b16 %v591
        %v857 = vunpack.c.l.b16 %v592
        %v858 = vunpack.c.h.b16 %v592
        %v859 = vunpack.c.l.b16 %v593
        %v860 = vunpack.c.h.b16 %v593
        %v861 = vunpack.c.l.b16 %v594
        %v862 = vunpack.c.h.b16 %v594
        %v863 = vunpack.c.l.b16 %v595
        %v864 = vunpack.c.h.b16 %v595
        %v865 = vunpack.c.l.b16 %v596
        %v866 = vunpack.c.h.b16 %v596
        %v867 = vunpack.c.l.b16 %v597
        %v868 = vunpack.c.h.b16 %v597
        %v869 = vunpack.c.l.b16 %v598
        %v870 = vunpack.c.h.b16 %v598
        %v871 = vunpack.c.l.b16 %v599
        %v872 = vunpack.c.h.b16 %v599
        %v873 = vunpack.c.l.b16 %v600
        %v874 = vunpack.c.h.b16 %v600
        %v875 = vunpack.c.l.b16 %v601
        %v876 = vunpack.c.h.b16 %v601
        %v877 = vunpack.c.l.b16 %v602
        %v878 = vunpack.c.h.b16 %v602
        %v879 = vunpack.c.l.b16 %v603
        %v880 = vunpack.c.h.b16 %v603
        %v881 = vunpack.c.l.b16 %v604
        %v882 = vunpack.c.h.b16 %v604
        %v883 = vunpack.c.l.b16 %v605
        %v884 = vunpack.c.h.b16 %v605
        %v885 = vunpack.c.l.b16 %v606
        %v886 = vunpack.c.h.b16 %v606
        %v887 = vunpack.c.l.b16 %v607
        %v888 = vunpack.c.h.b16 %v607
        %v889 = vunpack.c.l.b16 %v608
        %v890 = vunpack.c.h.b16 %v608
        %v891 = vunpack.c.l.b16 %v609
        %v892 = vunpack.c.h.b16 %v609
        %v893 = vunpack.c.l.b16 %v610
        %v894 = vunpack.c.h.b16 %v610
        %v895 = vunpack.c.l.b16 %v611
        %v896 = vunpack.c.h.b16 %v611
        %v897 = vunpack.c.l.b16 %v612
        %v898 = vunpack.c.h.b16 %v612
        %v899 = vunpack.c.l.b16 %v613
        %v900 = vunpack.c.h.b16 %v613
        %v901 = vunpack.c.l.b16 %v614
        %v902 = vunpack.c.h.b16 %v614
        %v903 = vunpack.c.l.b16 %v615
        %v904 = vunpack.c.h.b16 %v615
        %v905 = vunpack.c.l.b16 %v616
        %v906 = vunpack.c.h.b16 %v616
        %v907 = vunpack.c.l.b16 %v617
        %v908 = vunpack.c.h.b16 %v617
        %v909 = vunpack.c.l.b16 %v618
        %v910 = vunpack.c.h.b16 %v618
        %v911 = vunpack.c.l.b16 %v619
        %v912 = vunpack.c.h.b16 %v619
        %v913 = vunpack.c.l.b16 %v620
        %v914 = vunpack.c.h.b16 %v620
        %v915 = vunpack.c.l.b16 %v621
        %v916 = vunpack.c.h.b16 %v621
        %v917 = vunpack.c.l.b16 %v622
        %v918 = vunpack.c.h.b16 %v622
        %v919 = vunpack.c.l.b16 %v623
        %v920 = vunpack.c.h.b16 %v623
        %v921 = vunpack.c.l.b16 %v624
        %v922 = vunpack.c.h.b16 %v624
        %v923 = vunpack.c.l.b16 %v625
        %v924 = vunpack.c.h.b16 %v625
        %v925 = vunpack.c.l.b16 %v626
        %v926 = vunpack.c.h.b16 %v626
        %v927 = vunpack.c.l.b16 %v627
        %v928 = vunpack.c.h.b16 %v627
        %v929 = vunpack.c.l.b16 %v628
        %v930 = vunpack.c.h.b16 %v628
        %v931 = vunpack.c.l.b16 %v629
        %v932 = vunpack.c.h.b16 %v629
        %v933 = vunpack.c.l.b16 %v630
        %v934 = vunpack.c.h.b16 %v630
        %v935 = vunpack.c.l.b16 %v631
        %v936 = vunpack.c.h.b16 %v631
        %v937 = vunpack.c.l.b16 %v632
        %v938 = vunpack.c.h.b16 %v632
        %v939 = vunpack.c.l.b16 %v633
        %v940 = vunpack.c.h.b16 %v633
        %v941 = vunpack.c.l.b16 %v634
        %v942 = vunpack.c.h.b16 %v634
        %v943 = vunpack.c.l.b16 %v635
        %v944 = vunpack.c.h.b16 %v635
        %v945 = vunpack.c.l.b16 %v636
        %v946 = vunpack.c.h.b16 %v636
        %v947 = vunpack.c.l.b16 %v637
        %v948 = vunpack.c.h.b16 %v637
        %v949 = vunpack.c.l.b16 %v638
        %v950 = vunpack.c.h.b16 %v638
        %v951 = vunpack.c.l.b16 %v639
        %v952 = vunpack.c.h.b16 %v639
        %v953 = vunpack.c.l.b16 %v640
        %v954 = vunpack.c.h.b16 %v640
        %v955 = vunpack.c.l.b16 %v641
        %v956 = vunpack.c.h.b16 %v641
        %v957 = vunpack.c.l.b16 %v642
        %v958 = vunpack.c.h.b16 %v642
        %v959 = vunpack.c.l.b16 %v643
        %v960 = vunpack.c.h.b16 %v643
        %v961 = vunpack.c.l.b16 %v644
        %v962 = vunpack.c.h.b16 %v644
        %v963 = vunpack.c.l.b16 %v645
        %v964 = vunpack.c.h.b16 %v645
        %v965 = vunpack.c.l.b16 %v646
        %v966 = vunpack.c.h.b16 %v646
        %v967 = vpack.c.b16 %v781, %v775
        %v968 = vpack.c.b16 %v782, %v776
        %v969 = vpack.c.b16 %v783, %v777
        %v970 = vpack.c.b16 %v784, %v778
        %v971 = vpack.c.b16 %v785, %v779
        %v972 = vpack.c.b16 %v786, %v780
        %v973 = vpack.c.b16 %v793, %v787
        %v974 = vpack.c.b16 %v794, %v788
        %v975 = vpack.c.b16 %v795, %v789
        %v976 = vpack.c.b16 %v796, %v790
        %v977 = vpack.c.b16 %v797, %v791
        %v978 = vpack.c.b16 %v798, %v792
        %v979 = vpack.c.b16 %v805, %v799
        %v980 = vpack.c.b16 %v806, %v800
        %v981 = vpack.c.b16 %v807, %v801
        %v982 = vpack.c.b16 %v808, %v802
        %v983 = vpack.c.b16 %v809, %v803
        %v984 = vpack.c.b16 %v810, %v804
        %v985 = vpack.c.b16 %v817, %v811
        %v986 = vpack.c.b16 %v818, %v812
        %v987 = vpack.c.b16 %v819, %v813
        %v988 = vpack.c.b16 %v820, %v814
        %v989 = vpack.c.b16 %v821, %v815
        %v990 = vpack.c.b16 %v822, %v816
        %v991 = vpack.c.b16 %v829, %v823
        %v992 = vpack.c.b16 %v830, %v824
        %v993 = vpack.c.b16 %v831, %v825
        %v994 = vpack.c.b16 %v832, %v826
        %v995 = vpack.c.b16 %v833, %v827
        %v996 = vpack.c.b16 %v834, %v828
        %v997 = vpack.c.b16 %v841, %v835
        %v998 = vpack.c.b16 %v842, %v836
        %v999 = vpack.c.b16 %v843, %v837
        %v1000 = vpack.c.b16 %v844, %v838
        %v1001 = vpack.c.b16 %v845, %v839
        %v1002 = vpack.c.b16 %v846, %v840
        %v1003 = vpack.c.b16 %v853, %v847
        %v1004 = vpack.c.b16 %v854, %v848
        %v1005 = vpack.c.b16 %v855, %v849
        %v1006 = vpack.c.b16 %v856, %v850
        %v1007 = vpack.c.b16 %v857, %v851
        %v1008 = vpack.c.b16 %v858, %v852
        %v1009 = vpack.c.b16 %v865, %v859
        %v1010 = vpack.c.b16 %v866, %v860
        %v1011 = vpack.c.b16 %v867, %v861
        %v1012 = vpack.c.b16 %v868, %v862
        %v1013 = vpack.c.b16 %v869, %v863
        %v1014 = vpack.c.b16 %v870, %v864
        %v1015 = vpack.c.b16 %v877, %v871
        %v1016 = vpack.c.b16 %v878, %v872
        %v1017 = vpack.c.b16 %v879, %v873
        %v1018 = vpack.c.b16 %v880, %v874
        %v1019 = vpack.c.b16 %v881, %v875
        %v1020 = vpack.c.b16 %v882, %v876
        %v1021 = vpack.c.b16 %v889, %v883
        %v1022 = vpack.c.b16 %v890, %v884
        %v1023 = vpack.c.b16 %v891, %v885
        %v1024 = vpack.c.b16 %v892, %v886
        %v1025 = vpack.c.b16 %v893, %v887
        %v1026 = vpack.c.b16 %v894, %v888
        %v1027 = vpack.c.b16 %v901, %v895
        %v1028 = vpack.c.b16 %v902, %v896
        %v1029 = vpack.c.b16 %v903, %v897
        %v1030 = vpack.c.b16 %v904, %v898
        %v1031 = vpack.c.b16 %v905, %v899
        %v1032 = vpack.c.b16 %v906, %v900
        %v1033 = vpack.c.b16 %v913, %v907
        %v1034 = vpack.c.b16 %v914, %v908
        %v1035 = vpack.c.b16 %v915, %v909
        %v1036 = vpack.c.b16 %v916, %v910
        %v1037 = vpack.c.b16 %v917, %v911
        %v1038 = vpack.c.b16 %v918, %v912
        %v1039 = vpack.c.b16 %v925, %v919
        %v1040 = vpack.c.b16 %v926, %v920
        %v1041 = vpack.c.b16 %v927, %v921
        %v1042 = vpack.c.b16 %v928, %v922
        %v1043 = vpack.c.b16 %v929, %v923
        %v1044 = vpack.c.b16 %v930, %v924
        %v1045 = vpack.c.b16 %v937, %v931
        %v1046 = vpack.c.b16 %v938, %v932
        %v1047 = vpack.c.b16 %v939, %v933
        %v1048 = vpack.c.b16 %v940, %v934
        %v1049 = vpack.c.b16 %v941, %v935
        %v1050 = vpack.c.b16 %v942, %v936
        %v1051 = vpack.c.b16 %v949, %v943
        %v1052 = vpack.c.b16 %v950, %v944
        %v1053 = vpack.c.b16 %v951, %v945
        %v1054 = vpack.c.b16 %v952, %v946
        %v1055 = vpack.c.b16 %v953, %v947
        %v1056 = vpack.c.b16 %v954, %v948
        %v1057 = vpack.c.b16 %v961, %v955
        %v1058 = vpack.c.b16 %v962, %v956
        %v1059 = vpack.c.b16 %v963, %v957
        %v1060 = vpack.c.b16 %v964, %v958
        %v1061 = vpack.c.b16 %v965, %v959
        %v1062 = vpack.c.b16 %v966, %v960
        %1159 = vmatprep.subr.bf16.mxu0 %v968
        %1160 = vmatpush1.bf16.msra.mxu0 %v967
        %1161 = vmatprep.subr.bf16.mxu0 %v974
        %1162 = vmatpush1.bf16.msra.mxu0 %v973
        %1163 = vmatprep.subr.bf16.mxu0 %v980
        %1164 = vmatpush1.bf16.msra.mxu0 %v979
        %1165 = vmatprep.subr.bf16.mxu0 %v986
        %1166 = vmatpush1.bf16.msra.mxu0 %v985
        %1167 = vmatprep.subr.bf16.mxu0 %v992
        %1168 = vmatpush1.bf16.msra.mxu0 %v991
        %1169 = vmatprep.subr.bf16.mxu0 %v998
        %1170 = vmatpush1.bf16.msra.mxu0 %v997
        %1171 = vmatprep.subr.bf16.mxu0 %v1004
        %1172 = vmatpush1.bf16.msra.mxu0 %v1003
        %1173 = vmatprep.subr.bf16.mxu0 %v1010
        %1174 = vmatpush1.bf16.msra.mxu0 %v1009
        %1175 = vmatprep.subr.bf16.mxu0 %v1016
        %1176 = vmatpush1.bf16.msra.mxu0 %v1015
        %1177 = vmatprep.subr.bf16.mxu0 %v1022
        %1178 = vmatpush1.bf16.msra.mxu0 %v1021
        %1179 = vmatprep.subr.bf16.mxu0 %v1028
        %1180 = vmatpush1.bf16.msra.mxu0 %v1027
        %1181 = vmatprep.subr.bf16.mxu0 %v1034
        %1182 = vmatpush1.bf16.msra.mxu0 %v1033
        %1183 = vmatprep.subr.bf16.mxu0 %v1040
        %1184 = vmatpush1.bf16.msra.mxu0 %v1039
        %1185 = vmatprep.subr.bf16.mxu0 %v1046
        %1186 = vmatpush1.bf16.msra.mxu0 %v1045
        %1187 = vmatprep.subr.bf16.mxu0 %v1052
        %1188 = vmatpush1.bf16.msra.mxu0 %v1051
        %1189 = vmatprep.subr.bf16.mxu0 %v1058
        %1190 = vmatpush1.bf16.msra.mxu0 %v1057
        %1191 = vmatprep.mubr.bf16.mxu0 %v550
        %1192 = vmatmul.mubr.bf16.gmra.mrb[0].mxu0 %v549
        %v1193 = vpop.f32.mrb[0].mxu0
        %v1194 = vadd.f32 %v652, %v1193
        %v1195 = vpop.f32.mrb[0].mxu0
        %v1196 = vadd.f32 %v656, %v1195
        %v1197 = vpop.f32.mrb[0].mxu0
        %v1198 = vpop.f32.mrb[0].mxu0
        %1199 = vdwg.mxu0
        %1200 = vmatprep.subr.bf16.mxu0 %v970
        %1201 = vmatpush1.bf16.msra.mxu0 %v969
        %1202 = vmatprep.subr.bf16.mxu0 %v976
        %1203 = vmatpush1.bf16.msra.mxu0 %v975
        %1204 = vmatprep.subr.bf16.mxu0 %v982
        %1205 = vmatpush1.bf16.msra.mxu0 %v981
        %1206 = vmatprep.subr.bf16.mxu0 %v988
        %1207 = vmatpush1.bf16.msra.mxu0 %v987
        %1208 = vmatprep.subr.bf16.mxu0 %v994
        %1209 = vmatpush1.bf16.msra.mxu0 %v993
        %1210 = vmatprep.subr.bf16.mxu0 %v1000
        %1211 = vmatpush1.bf16.msra.mxu0 %v999
        %1212 = vmatprep.subr.bf16.mxu0 %v1006
        %1213 = vmatpush1.bf16.msra.mxu0 %v1005
        %1214 = vmatprep.subr.bf16.mxu0 %v1012
        %1215 = vmatpush1.bf16.msra.mxu0 %v1011
        %1216 = vmatprep.subr.bf16.mxu0 %v1018
        %1217 = vmatpush1.bf16.msra.mxu0 %v1017
        %1218 = vmatprep.subr.bf16.mxu0 %v1024
        %1219 = vmatpush1.bf16.msra.mxu0 %v1023
        %1220 = vmatprep.subr.bf16.mxu0 %v1030
        %1221 = vmatpush1.bf16.msra.mxu0 %v1029
        %1222 = vmatprep.subr.bf16.mxu0 %v1036
        %1223 = vmatpush1.bf16.msra.mxu0 %v1035
        %1224 = vmatprep.subr.bf16.mxu0 %v1042
        %1225 = vmatpush1.bf16.msra.mxu0 %v1041
        %1226 = vmatprep.subr.bf16.mxu0 %v1048
        %1227 = vmatpush1.bf16.msra.mxu0 %v1047
        %1228 = vmatprep.subr.bf16.mxu0 %v1054
        %1229 = vmatpush1.bf16.msra.mxu0 %v1053
        %1230 = vmatprep.subr.bf16.mxu0 %v1060
        %1231 = vmatpush1.bf16.msra.mxu0 %v1059
        %1232 = vmatprep.mubr.bf16.mxu0 %v550
        %1233 = vmatmul.mubr.bf16.gmra.mrb[0].mxu0 %v549
        %v1234 = vpop.f32.mrb[0].mxu0
        %v1235 = vadd.f32 %v660, %v1234
        %v1236 = vpop.f32.mrb[0].mxu0
        %v1237 = vadd.f32 %v664, %v1236
        %v1238 = vpop.f32.mrb[0].mxu0
        %v1239 = vpop.f32.mrb[0].mxu0
        %1240 = vdwg.mxu0
        %1241 = vmatprep.subr.bf16.mxu0 %v972
        %1242 = vmatpush1.bf16.msra.mxu0 %v971
        %1243 = vmatprep.subr.bf16.mxu0 %v978
        %1244 = vmatpush1.bf16.msra.mxu0 %v977
        %1245 = vmatprep.subr.bf16.mxu0 %v984
        %1246 = vmatpush1.bf16.msra.mxu0 %v983
        %1247 = vmatprep.subr.bf16.mxu0 %v990
        %1248 = vmatpush1.bf16.msra.mxu0 %v989
        %1249 = vmatprep.subr.bf16.mxu0 %v996
        %1250 = vmatpush1.bf16.msra.mxu0 %v995
        %1251 = vmatprep.subr.bf16.mxu0 %v1002
        %1252 = vmatpush1.bf16.msra.mxu0 %v1001
        %1253 = vmatprep.subr.bf16.mxu0 %v1008
        %1254 = vmatpush1.bf16.msra.mxu0 %v1007
        %1255 = vmatprep.subr.bf16.mxu0 %v1014
        %1256 = vmatpush1.bf16.msra.mxu0 %v1013
        %1257 = vmatprep.subr.bf16.mxu0 %v1020
        %1258 = vmatpush1.bf16.msra.mxu0 %v1019
        %1259 = vmatprep.subr.bf16.mxu0 %v1026
        %1260 = vmatpush1.bf16.msra.mxu0 %v1025
        %1261 = vmatprep.subr.bf16.mxu0 %v1032
        %1262 = vmatpush1.bf16.msra.mxu0 %v1031
        %1263 = vmatprep.subr.bf16.mxu0 %v1038
        %1264 = vmatpush1.bf16.msra.mxu0 %v1037
        %1265 = vmatprep.subr.bf16.mxu0 %v1044
        %1266 = vmatpush1.bf16.msra.mxu0 %v1043
        %1267 = vmatprep.subr.bf16.mxu0 %v1050
        %1268 = vmatpush1.bf16.msra.mxu0 %v1049
        %1269 = vmatprep.subr.bf16.mxu0 %v1056
        %1270 = vmatpush1.bf16.msra.mxu0 %v1055
        %1271 = vmatprep.subr.bf16.mxu0 %v1062
        %1272 = vmatpush1.bf16.msra.mxu0 %v1061
        %1273 = vmatprep.mubr.bf16.mxu0 %v550
        %1274 = vmatmul.mubr.bf16.gmra.mrb[0].mxu0 %v549
        %v1275 = vpop.f32.mrb[0].mxu0
        %v1276 = vadd.f32 %v668, %v1275
        %v1277 = vpop.f32.mrb[0].mxu0
        %v1278 = vadd.f32 %v672, %v1277
        %v1279 = vpop.f32.mrb[0].mxu0
        %v1280 = vpop.f32.mrb[0].mxu0
        %1281 = vdwg.mxu0
        %v1282 = vlaneseq
        %v1283 = vand.u32 %v1282, 127
        %v1284 = vstv %s546
        %vm1285 = vcmp.lt.s32.totalorder %v1283, %v1284
        %v1286 = vpack.c.bf16 %v1194, %v1194
        %v1287 = vpack.c.bf16 %v1235, %v1235
        %v1288 = vpack.c.bf16 %v1276, %v1276
        %1289 = vmatprep.subr.bf16.mxu0 0
        %1290 = vmatpush1.bf16.xpose.msra.mxu0 %v1287
        %1291 = vmatprep.subr.bf16.mxu0 0
        %1292 = vmatpush1.bf16.xpose.msra.mxu0 0
        %1293 = vmatprep.subr.bf16.mxu0 0
        %1294 = vmatpush1.bf16.xpose.msra.mxu0 0
        %1295 = vmatprep.subr.bf16.mxu0 0
        %1296 = vmatpush1.bf16.xpose.msra.mxu0 0
        %1297 = vmatprep.subr.bf16.mxu0 0
        %1298 = vmatpush1.bf16.xpose.msra.mxu0 0
        %1299 = vmatprep.subr.bf16.mxu0 0
        %1300 = vmatpush1.bf16.xpose.msra.mxu0 0
        %1301 = vmatprep.subr.bf16.mxu0 0
        %1302 = vmatpush1.bf16.xpose.msra.mxu0 0
        %1303 = vmatprep.subr.bf16.mxu0 0
        %1304 = vmatpush1.bf16.xpose.msra.mxu0 0
        %1305 = vmatprep.subr.bf16.mxu0 0
        %1306 = vmatpush1.bf16.xpose.msra.mxu0 0
        %1307 = vmatprep.subr.bf16.mxu0 0
        %1308 = vmatpush1.bf16.xpose.msra.mxu0 0
        %1309 = vmatprep.subr.bf16.mxu0 0
        %1310 = vmatpush1.bf16.xpose.msra.mxu0 0
        %1311 = vmatprep.subr.bf16.mxu0 0
        %1312 = vmatpush1.bf16.xpose.msra.mxu0 0
        %1313 = vmatprep.subr.bf16.mxu0 0
        %1314 = vmatpush1.bf16.xpose.msra.mxu0 0
        %1315 = vmatprep.subr.bf16.mxu0 0
        %1316 = vmatpush1.bf16.xpose.msra.mxu0 0
        %1317 = vmatprep.subr.bf16.mxu0 0
        %1318 = vmatpush1.bf16.xpose.msra.mxu0 0
        %1319 = vmatprep.subr.bf16.mxu0 0
        %1320 = vmatpush1.bf16.xpose.msra.mxu0 0
        %1321 = vmatprep.mubr.bf16.mxu0 0
        %1322 = vmatmul.mubr.bf16.gmra.mrb[0].mxu0 %v1286
        %v1323 = vpop.f32.mrb[0].mxu0
        %v1324 = vadd.f32 0.0, %v1323
        %v1325 = vpop.f32.mrb[0].mxu0
        %v1326 = vpop.f32.mrb[0].mxu0
        %v1327 = vpop.f32.mrb[0].mxu0
        %1328 = vdwg.mxu0
        %v1329 = vsel %vm1285, 1, 0
        %vm1330 = vcmp.eq.s32.totalorder %v1329, 1
        %v1331 = vsel %vm1330, %v1324, -1000000.0
        %vm1332 = vcmask 64512
        %v1333 = vsel %vm1332, %v1331, -inf
        %1334 = vmax.xlane.f32.xlu0 %v1333
        %v1335 = vpop.xlane.xlu0 %1334
        %v1336 = vsub.f32 %v1331, %v1335
        %v1337 = vmul.f32 %v1336, 1.442695
        %v1338 = vpow.pop %v1337
        %v1339 = vsel %vm1332, %v1338, 0.0
        %1340 = vadd.xlane.f32.xlu0 %v1339
        %v1341 = vpop.xlane.xlu0 %1340
        %v1342 = vrcp.pop %v1341
        %v1343 = vmul.f32 %v1338, %v1342
        %v1344 = vpack.c.bf16 %v1343, %v1343
        %v1346 = vsel %vm1332, %v1344, 0
        %vm1348 = vcmask 1043456
        %v1350 = vsel %vm1348, %v1288, 0
        %1352 = vmatprep.subr.bf16.mxu0 0
        %1353 = vmatpush1.bf16.msra.mxu0 %v1350
        %1354 = vmatprep.subr.bf16.mxu0 0
        %1355 = vmatpush1.bf16.msra.mxu0 0
        %1356 = vmatprep.subr.bf16.mxu0 0
        %1357 = vmatpush1.bf16.msra.mxu0 0
        %1358 = vmatprep.subr.bf16.mxu0 0
        %1359 = vmatpush1.bf16.msra.mxu0 0
        %1360 = vmatprep.subr.bf16.mxu0 0
        %1361 = vmatpush1.bf16.msra.mxu0 0
        %1362 = vmatprep.subr.bf16.mxu0 0
        %1363 = vmatpush1.bf16.msra.mxu0 0
        %1364 = vmatprep.subr.bf16.mxu0 0
        %1365 = vmatpush1.bf16.msra.mxu0 0
        %1366 = vmatprep.subr.bf16.mxu0 0
        %1367 = vmatpush1.bf16.msra.mxu0 0
        %1368 = vmatprep.subr.bf16.mxu0 0
        %1369 = vmatpush1.bf16.msra.mxu0 0
        %1370 = vmatprep.subr.bf16.mxu0 0
        %1371 = vmatpush1.bf16.msra.mxu0 0
        %1372 = vmatprep.subr.bf16.mxu0 0
        %1373 = vmatpush1.bf16.msra.mxu0 0
        %1374 = vmatprep.subr.bf16.mxu0 0
        %1375 = vmatpush1.bf16.msra.mxu0 0
        %1376 = vmatprep.subr.bf16.mxu0 0
        %1377 = vmatpush1.bf16.msra.mxu0 0
        %1378 = vmatprep.subr.bf16.mxu0 0
        %1379 = vmatpush1.bf16.msra.mxu0 0
        %1380 = vmatprep.subr.bf16.mxu0 0
        %1381 = vmatpush1.bf16.msra.mxu0 0
        %1382 = vmatprep.subr.bf16.mxu0 0
        %1383 = vmatpush1.bf16.msra.mxu0 0
        %1384 = vmatprep.mubr.bf16.mxu0 0
        %1385 = vmatmul.mubr.bf16.gmra.mrb[0].mxu0 %v1346
        %v1386 = vpop.f32.mrb[0].mxu0
        %v1387 = vadd.f32 0.0, %v1386
        %v1388 = vpop.f32.mrb[0].mxu0
        %v1389 = vpop.f32.mrb[0].mxu0
        %v1390 = vpop.f32.mrb[0].mxu0
        %1391 = vdwg.mxu0
        %v1392 = vpack.c.bf16 %v1196, %v1196
        %v1393 = vpack.c.bf16 %v1237, %v1237
        %v1394 = vpack.c.bf16 %v1278, %v1278
        %1395 = vmatprep.subr.bf16.mxu0 0
        %1396 = vmatpush1.bf16.xpose.msra.mxu0 %v1393
        %1397 = vmatprep.subr.bf16.mxu0 0
        %1398 = vmatpush1.bf16.xpose.msra.mxu0 0
        %1399 = vmatprep.subr.bf16.mxu0 0
        %1400 = vmatpush1.bf16.xpose.msra.mxu0 0
        %1401 = vmatprep.subr.bf16.mxu0 0
        %1402 = vmatpush1.bf16.xpose.msra.mxu0 0
        %1403 = vmatprep.subr.bf16.mxu0 0
        %1404 = vmatpush1.bf16.xpose.msra.mxu0 0
        %1405 = vmatprep.subr.bf16.mxu0 0
        %1406 = vmatpush1.bf16.xpose.msra.mxu0 0
        %1407 = vmatprep.subr.bf16.mxu0 0
        %1408 = vmatpush1.bf16.xpose.msra.mxu0 0
        %1409 = vmatprep.subr.bf16.mxu0 0
        %1410 = vmatpush1.bf16.xpose.msra.mxu0 0
        %1411 = vmatprep.subr.bf16.mxu0 0
        %1412 = vmatpush1.bf16.xpose.msra.mxu0 0
        %1413 = vmatprep.subr.bf16.mxu0 0
        %1414 = vmatpush1.bf16.xpose.msra.mxu0 0
        %1415 = vmatprep.subr.bf16.mxu0 0
        %1416 = vmatpush1.bf16.xpose.msra.mxu0 0
        %1417 = vmatprep.subr.bf16.mxu0 0
        %1418 = vmatpush1.bf16.xpose.msra.mxu0 0
        %1419 = vmatprep.subr.bf16.mxu0 0
        %1420 = vmatpush1.bf16.xpose.msra.mxu0 0
        %1421 = vmatprep.subr.bf16.mxu0 0
        %1422 = vmatpush1.bf16.xpose.msra.mxu0 0
        %1423 = vmatprep.subr.bf16.mxu0 0
        %1424 = vmatpush1.bf16.xpose.msra.mxu0 0
        %1425 = vmatprep.subr.bf16.mxu0 0
        %1426 = vmatpush1.bf16.xpose.msra.mxu0 0
        %1427 = vmatprep.mubr.bf16.mxu0 0
        %1428 = vmatmul.mubr.bf16.gmra.mrb[0].mxu0 %v1392
        %v1429 = vpop.f32.mrb[0].mxu0
        %v1430 = vadd.f32 0.0, %v1429
        %v1431 = vpop.f32.mrb[0].mxu0
        %v1432 = vpop.f32.mrb[0].mxu0
        %v1433 = vpop.f32.mrb[0].mxu0
        %1434 = vdwg.mxu0
        %v1435 = vsel %vm1330, %v1430, -1000000.0
        %v1436 = vsel %vm1332, %v1435, -inf
        %1437 = vmax.xlane.f32.xlu0 %v1436
        %v1438 = vpop.xlane.xlu0 %1437
        %v1439 = vsub.f32 %v1435, %v1438
        %v1440 = vmul.f32 %v1439, 1.442695
        %v1441 = vpow.pop %v1440
        %v1442 = vsel %vm1332, %v1441, 0.0
        %1443 = vadd.xlane.f32.xlu0 %v1442
        %v1444 = vpop.xlane.xlu0 %1443
        %v1445 = vrcp.pop %v1444
        %v1446 = vmul.f32 %v1441, %v1445
        %v1447 = vpack.c.bf16 %v1446, %v1446
        %v1449 = vsel %vm1332, %v1447, 0
        %v1452 = vsel %vm1348, %v1394, 0
        %1454 = vmatprep.subr.bf16.mxu0 0
        %1455 = vmatpush1.bf16.msra.mxu0 %v1452
        %1456 = vmatprep.subr.bf16.mxu0 0
        %1457 = vmatpush1.bf16.msra.mxu0 0
        %1458 = vmatprep.subr.bf16.mxu0 0
        %1459 = vmatpush1.bf16.msra.mxu0 0
        %1460 = vmatprep.subr.bf16.mxu0 0
        %1461 = vmatpush1.bf16.msra.mxu0 0
        %1462 = vmatprep.subr.bf16.mxu0 0
        %1463 = vmatpush1.bf16.msra.mxu0 0
        %1464 = vmatprep.subr.bf16.mxu0 0
        %1465 = vmatpush1.bf16.msra.mxu0 0
        %1466 = vmatprep.subr.bf16.mxu0 0
        %1467 = vmatpush1.bf16.msra.mxu0 0
        %1468 = vmatprep.subr.bf16.mxu0 0
        %1469 = vmatpush1.bf16.msra.mxu0 0
        %1470 = vmatprep.subr.bf16.mxu0 0
        %1471 = vmatpush1.bf16.msra.mxu0 0
        %1472 = vmatprep.subr.bf16.mxu0 0
        %1473 = vmatpush1.bf16.msra.mxu0 0
        %1474 = vmatprep.subr.bf16.mxu0 0
        %1475 = vmatpush1.bf16.msra.mxu0 0
        %1476 = vmatprep.subr.bf16.mxu0 0
        %1477 = vmatpush1.bf16.msra.mxu0 0
        %1478 = vmatprep.subr.bf16.mxu0 0
        %1479 = vmatpush1.bf16.msra.mxu0 0
        %1480 = vmatprep.subr.bf16.mxu0 0
        %1481 = vmatpush1.bf16.msra.mxu0 0
        %1482 = vmatprep.subr.bf16.mxu0 0
        %1483 = vmatpush1.bf16.msra.mxu0 0
        %1484 = vmatprep.subr.bf16.mxu0 0
        %1485 = vmatpush1.bf16.msra.mxu0 0
        %1486 = vmatprep.mubr.bf16.mxu0 0
        %1487 = vmatmul.mubr.bf16.gmra.mrb[0].mxu0 %v1449
        %v1488 = vpop.f32.mrb[0].mxu0
        %v1489 = vadd.f32 0.0, %v1488
        %v1490 = vpop.f32.mrb[0].mxu0
        %v1491 = vpop.f32.mrb[0].mxu0
        %v1492 = vpop.f32.mrb[0].mxu0
        %1493 = vdwg.mxu0
        %v1494 = vpack.c.bf16 %v1387, %v1387
        %v1495 = vpack.c.bf16 %v1489, %v1489
        %v1496 = vld [vmem:[#allocation9] sm:$0xff]
        %v1497 = vld [vmem:[#allocation9 + $0x8] sm:$0xff]
        %v1498 = vld [vmem:[#allocation9 + $0x10] sm:$0xff]
        %v1499 = vld [vmem:[#allocation9 + $0x18] sm:$0xff]
        %v1500 = vld [vmem:[#allocation9 + $0x20] sm:$0xff]
        %v1501 = vld [vmem:[#allocation9 + $0x28] sm:$0xff]
        %v1502 = vld [vmem:[#allocation9 + $0x30] sm:$0xff]
        %v1503 = vld [vmem:[#allocation9 + $0x38] sm:$0xff]
        %v1504 = vld [vmem:[#allocation9 + $0x40] sm:$0xff]
        %v1505 = vld [vmem:[#allocation9 + $0x48] sm:$0xff]
        %v1506 = vld [vmem:[#allocation9 + $0x50] sm:$0xff]
        %v1507 = vld [vmem:[#allocation9 + $0x58] sm:$0xff]
        %v1508 = vld [vmem:[#allocation9 + $0x60] sm:$0xff]
        %v1509 = vld [vmem:[#allocation9 + $0x68] sm:$0xff]
        %v1510 = vld [vmem:[#allocation9 + $0x70] sm:$0xff]
        %v1511 = vld [vmem:[#allocation9 + $0x78] sm:$0xff]
        %v1512 = vld [vmem:[#allocation9 + $0x80] sm:$0xff]
        %v1513 = vld [vmem:[#allocation9 + $0x88] sm:$0xff]
        %v1514 = vld [vmem:[#allocation9 + $0x90] sm:$0xff]
        %v1515 = vld [vmem:[#allocation9 + $0x98] sm:$0xff]
        %v1516 = vld [vmem:[#allocation9 + $0xa0] sm:$0xff]
        %v1517 = vld [vmem:[#allocation9 + $0xa8] sm:$0xff]
        %v1518 = vld [vmem:[#allocation9 + $0xb0] sm:$0xff]
        %v1519 = vld [vmem:[#allocation9 + $0xb8] sm:$0xff]
        %v1520 = vld [vmem:[#allocation9 + $0xc0] sm:$0xff]
        %v1521 = vld [vmem:[#allocation9 + $0xc8] sm:$0xff]
        %v1522 = vld [vmem:[#allocation9 + $0xd0] sm:$0xff]
        %v1523 = vld [vmem:[#allocation9 + $0xd8] sm:$0xff]
        %v1524 = vld [vmem:[#allocation9 + $0xe0] sm:$0xff]
        %v1525 = vld [vmem:[#allocation9 + $0xe8] sm:$0xff]
        %v1526 = vld [vmem:[#allocation9 + $0xf0] sm:$0xff]
        %v1527 = vld [vmem:[#allocation9 + $0xf8] sm:$0xff]
        %v1528 = vld [vmem:[%s5] sm:$0x3]
        %v1530 = vlaneseq
        %v1531 = vshrl.u32 %v1530, 7
        %v1532 = vsub.s32 0, %v1531
        %v1533 = vrot.slane %v1528, %v1532
        %v1534 = vlaneseq
        %v1535 = vshrl.u32 %v1534, 7
        %v1536 = vsub.s32 1, %v1535
        %v1537 = vrot.slane %v1528, %v1536
        %v1572 = vunpack.c.l.b16 %v1496
        %v1573 = vunpack.c.h.b16 %v1496
        %v1574 = vunpack.c.l.b16 %v1497
        %v1575 = vunpack.c.h.b16 %v1497
        %v1576 = vunpack.c.l.b16 %v1498
        %v1577 = vunpack.c.h.b16 %v1498
        %v1578 = vunpack.c.l.b16 %v1499
        %v1579 = vunpack.c.h.b16 %v1499
        %v1580 = vunpack.c.l.b16 %v1500
        %v1581 = vunpack.c.h.b16 %v1500
        %v1582 = vunpack.c.l.b16 %v1501
        %v1583 = vunpack.c.h.b16 %v1501
        %v1584 = vunpack.c.l.b16 %v1502
        %v1585 = vunpack.c.h.b16 %v1502
        %v1586 = vunpack.c.l.b16 %v1503
        %v1587 = vunpack.c.h.b16 %v1503
        %v1588 = vunpack.c.l.b16 %v1504
        %v1589 = vunpack.c.h.b16 %v1504
        %v1590 = vunpack.c.l.b16 %v1505
        %v1591 = vunpack.c.h.b16 %v1505
        %v1592 = vunpack.c.l.b16 %v1506
        %v1593 = vunpack.c.h.b16 %v1506
        %v1594 = vunpack.c.l.b16 %v1507
        %v1595 = vunpack.c.h.b16 %v1507
        %v1596 = vunpack.c.l.b16 %v1508
        %v1597 = vunpack.c.h.b16 %v1508
        %v1598 = vunpack.c.l.b16 %v1509
        %v1599 = vunpack.c.h.b16 %v1509
        %v1600 = vunpack.c.l.b16 %v1510
        %v1601 = vunpack.c.h.b16 %v1510
        %v1602 = vunpack.c.l.b16 %v1511
        %v1603 = vunpack.c.h.b16 %v1511
        %v1604 = vunpack.c.l.b16 %v1512
        %v1605 = vunpack.c.h.b16 %v1512
        %v1606 = vunpack.c.l.b16 %v1513
        %v1607 = vunpack.c.h.b16 %v1513
        %v1608 = vunpack.c.l.b16 %v1514
        %v1609 = vunpack.c.h.b16 %v1514
        %v1610 = vunpack.c.l.b16 %v1515
        %v1611 = vunpack.c.h.b16 %v1515
        %v1612 = vunpack.c.l.b16 %v1516
        %v1613 = vunpack.c.h.b16 %v1516
        %v1614 = vunpack.c.l.b16 %v1517
        %v1615 = vunpack.c.h.b16 %v1517
        %v1616 = vunpack.c.l.b16 %v1518
        %v1617 = vunpack.c.h.b16 %v1518
        %v1618 = vunpack.c.l.b16 %v1519
        %v1619 = vunpack.c.h.b16 %v1519
        %v1620 = vunpack.c.l.b16 %v1520
        %v1621 = vunpack.c.h.b16 %v1520
        %v1622 = vunpack.c.l.b16 %v1521
        %v1623 = vunpack.c.h.b16 %v1521
        %v1624 = vunpack.c.l.b16 %v1522
        %v1625 = vunpack.c.h.b16 %v1522
        %v1626 = vunpack.c.l.b16 %v1523
        %v1627 = vunpack.c.h.b16 %v1523
        %v1628 = vunpack.c.l.b16 %v1524
        %v1629 = vunpack.c.h.b16 %v1524
        %v1630 = vunpack.c.l.b16 %v1525
        %v1631 = vunpack.c.h.b16 %v1525
        %v1632 = vunpack.c.l.b16 %v1526
        %v1633 = vunpack.c.h.b16 %v1526
        %v1634 = vunpack.c.l.b16 %v1527
        %v1635 = vunpack.c.h.b16 %v1527
        %v1636 = vpack.c.b16 %v1574, %v1572
        %v1637 = vpack.c.b16 %v1575, %v1573
        %v1638 = vpack.c.b16 %v1578, %v1576
        %v1639 = vpack.c.b16 %v1579, %v1577
        %v1640 = vpack.c.b16 %v1582, %v1580
        %v1641 = vpack.c.b16 %v1583, %v1581
        %v1642 = vpack.c.b16 %v1586, %v1584
        %v1643 = vpack.c.b16 %v1587, %v1585
        %v1644 = vpack.c.b16 %v1590, %v1588
        %v1645 = vpack.c.b16 %v1591, %v1589
        %v1646 = vpack.c.b16 %v1594, %v1592
        %v1647 = vpack.c.b16 %v1595, %v1593
        %v1648 = vpack.c.b16 %v1598, %v1596
        %v1649 = vpack.c.b16 %v1599, %v1597
        %v1650 = vpack.c.b16 %v1602, %v1600
        %v1651 = vpack.c.b16 %v1603, %v1601
        %v1652 = vpack.c.b16 %v1606, %v1604
        %v1653 = vpack.c.b16 %v1607, %v1605
        %v1654 = vpack.c.b16 %v1610, %v1608
        %v1655 = vpack.c.b16 %v1611, %v1609
        %v1656 = vpack.c.b16 %v1614, %v1612
        %v1657 = vpack.c.b16 %v1615, %v1613
        %v1658 = vpack.c.b16 %v1618, %v1616
        %v1659 = vpack.c.b16 %v1619, %v1617
        %v1660 = vpack.c.b16 %v1622, %v1620
        %v1661 = vpack.c.b16 %v1623, %v1621
        %v1662 = vpack.c.b16 %v1626, %v1624
        %v1663 = vpack.c.b16 %v1627, %v1625
        %v1664 = vpack.c.b16 %v1630, %v1628
        %v1665 = vpack.c.b16 %v1631, %v1629
        %v1666 = vpack.c.b16 %v1634, %v1632
        %v1667 = vpack.c.b16 %v1635, %v1633
        %1700 = vmatprep.subr.bf16.mxu0 %v1637
        %1701 = vmatpush1.bf16.msra.mxu0 %v1636
        %1702 = vmatprep.subr.bf16.mxu0 %v1639
        %1703 = vmatpush1.bf16.msra.mxu0 %v1638
        %1704 = vmatprep.subr.bf16.mxu0 %v1641
        %1705 = vmatpush1.bf16.msra.mxu0 %v1640
        %1706 = vmatprep.subr.bf16.mxu0 %v1643
        %1707 = vmatpush1.bf16.msra.mxu0 %v1642
        %1708 = vmatprep.subr.bf16.mxu0 %v1645
        %1709 = vmatpush1.bf16.msra.mxu0 %v1644
        %1710 = vmatprep.subr.bf16.mxu0 %v1647
        %1711 = vmatpush1.bf16.msra.mxu0 %v1646
        %1712 = vmatprep.subr.bf16.mxu0 %v1649
        %1713 = vmatpush1.bf16.msra.mxu0 %v1648
        %1714 = vmatprep.subr.bf16.mxu0 %v1651
        %1715 = vmatpush1.bf16.msra.mxu0 %v1650
        %1716 = vmatprep.subr.bf16.mxu0 %v1653
        %1717 = vmatpush1.bf16.msra.mxu0 %v1652
        %1718 = vmatprep.subr.bf16.mxu0 %v1655
        %1719 = vmatpush1.bf16.msra.mxu0 %v1654
        %1720 = vmatprep.subr.bf16.mxu0 %v1657
        %1721 = vmatpush1.bf16.msra.mxu0 %v1656
        %1722 = vmatprep.subr.bf16.mxu0 %v1659
        %1723 = vmatpush1.bf16.msra.mxu0 %v1658
        %1724 = vmatprep.subr.bf16.mxu0 %v1661
        %1725 = vmatpush1.bf16.msra.mxu0 %v1660
        %1726 = vmatprep.subr.bf16.mxu0 %v1663
        %1727 = vmatpush1.bf16.msra.mxu0 %v1662
        %1728 = vmatprep.subr.bf16.mxu0 %v1665
        %1729 = vmatpush1.bf16.msra.mxu0 %v1664
        %1730 = vmatprep.subr.bf16.mxu0 %v1667
        %1731 = vmatpush1.bf16.msra.mxu0 %v1666
        %1732 = vmatprep.mubr.bf16.mxu0 %v1495
        %1733 = vmatmul.mubr.bf16.gmra.mrb[0].mxu0 %v1494
        %v1734 = vpop.f32.mrb[0].mxu0
        %v1735 = vadd.f32 %v1533, %v1734
        %v1736 = vpop.f32.mrb[0].mxu0
        %v1737 = vadd.f32 %v1537, %v1736
        %v1738 = vpop.f32.mrb[0].mxu0
        %v1739 = vpop.f32.mrb[0].mxu0
        %1740 = vdwg.mxu0
        %v1741 = vadd.f32 %v1735, %v547
        %v1742 = vadd.f32 %v1737, %v548
        %v1743 = vld [vmem:[%s6] sm:$0x3]
        %v1744 = vld [vmem:[#allocation10] sm:$0x3]
        %v1745 = vadd.f32 %v1741, %v1742
        %1746 = vadd.xlane.f32.xlu0 %v1745
        %v1747 = vpop.xlane.xlu0 %1746
        %v1748 = vrcp.pop 256.0
        %v1749 = vmul.f32 %v1747, %v1748
        %v1750 = vsub.f32 %v1741, %v1749
        %v1751 = vsub.f32 %v1742, %v1749
        %v1752 = vmul.f32 %v1750, %v1750
        %v1753 = vmul.f32 %v1751, %v1751
        %v1754 = vadd.f32 %v1752, %v1753
        %1755 = vadd.xlane.f32.xlu0 %v1754
        %v1756 = vpop.xlane.xlu0 %1755
        %v1757 = vmul.f32 %v1756, %v1748
        %v1758 = vadd.f32 %v1757, 1e-05
        %v1759 = vrsqrt.pop %v1758
        %v1760 = vmul.f32 %v1750, %v1759
        %v1761 = vmul.f32 %v1751, %v1759
        %v1763 = vlaneseq
        %v1764 = vshrl.u32 %v1763, 7
        %v1765 = vsub.s32 0, %v1764
        %v1766 = vrot.slane %v1743, %v1765
        %v1767 = vlaneseq
        %v1768 = vshrl.u32 %v1767, 7
        %v1769 = vsub.s32 1, %v1768
        %v1770 = vrot.slane %v1743, %v1769
        %v1773 = vmul.f32 %v1760, %v1766
        %v1774 = vmul.f32 %v1761, %v1770
        %v1776 = vlaneseq
        %v1777 = vshrl.u32 %v1776, 7
        %v1778 = vsub.s32 0, %v1777
        %v1779 = vrot.slane %v1744, %v1778
        %v1780 = vlaneseq
        %v1781 = vshrl.u32 %v1780, 7
        %v1782 = vsub.s32 1, %v1781
        %v1783 = vrot.slane %v1744, %v1782
        %v1786 = vadd.f32 %v1773, %v1779
        %v1787 = vadd.f32 %v1774, %v1783
        %v1788 = vpack.c.bf16 %v1786, %v1786
        %v1789 = vpack.c.bf16 %v1787, %v1787
        %v1790 = vld [vmem:[#allocation12] sm:$0xff]
        %v1791 = vld [vmem:[#allocation12 + $0x8] sm:$0xff]
        %v1792 = vld [vmem:[#allocation12 + $0x10] sm:$0xff]
        %v1793 = vld [vmem:[#allocation12 + $0x18] sm:$0xff]
        %v1794 = vld [vmem:[#allocation12 + $0x20] sm:$0xff]
        %v1795 = vld [vmem:[#allocation12 + $0x28] sm:$0xff]
        %v1796 = vld [vmem:[#allocation12 + $0x30] sm:$0xff]
        %v1797 = vld [vmem:[#allocation12 + $0x38] sm:$0xff]
        %v1798 = vld [vmem:[#allocation12 + $0x40] sm:$0xff]
        %v1799 = vld [vmem:[#allocation12 + $0x48] sm:$0xff]
        %v1800 = vld [vmem:[#allocation12 + $0x50] sm:$0xff]
        %v1801 = vld [vmem:[#allocation12 + $0x58] sm:$0xff]
        %v1802 = vld [vmem:[#allocation12 + $0x60] sm:$0xff]
        %v1803 = vld [vmem:[#allocation12 + $0x68] sm:$0xff]
        %v1804 = vld [vmem:[#allocation12 + $0x70] sm:$0xff]
        %v1805 = vld [vmem:[#allocation12 + $0x78] sm:$0xff]
        %v1806 = vld [vmem:[#allocation12 + $0x80] sm:$0xff]
        %v1807 = vld [vmem:[#allocation12 + $0x88] sm:$0xff]
        %v1808 = vld [vmem:[#allocation12 + $0x90] sm:$0xff]
        %v1809 = vld [vmem:[#allocation12 + $0x98] sm:$0xff]
        %v1810 = vld [vmem:[#allocation12 + $0xa0] sm:$0xff]
        %v1811 = vld [vmem:[#allocation12 + $0xa8] sm:$0xff]
        %v1812 = vld [vmem:[#allocation12 + $0xb0] sm:$0xff]
        %v1813 = vld [vmem:[#allocation12 + $0xb8] sm:$0xff]
        %v1814 = vld [vmem:[#allocation12 + $0xc0] sm:$0xff]
        %v1815 = vld [vmem:[#allocation12 + $0xc8] sm:$0xff]
        %v1816 = vld [vmem:[#allocation12 + $0xd0] sm:$0xff]
        %v1817 = vld [vmem:[#allocation12 + $0xd8] sm:$0xff]
        %v1818 = vld [vmem:[#allocation12 + $0xe0] sm:$0xff]
        %v1819 = vld [vmem:[#allocation12 + $0xe8] sm:$0xff]
        %v1820 = vld [vmem:[#allocation12 + $0xf0] sm:$0xff]
        %v1821 = vld [vmem:[#allocation12 + $0xf8] sm:$0xff]
        %v1822 = vld [vmem:[#allocation12 + $0x100] sm:$0xff]
        %v1823 = vld [vmem:[#allocation12 + $0x108] sm:$0xff]
        %v1824 = vld [vmem:[#allocation12 + $0x110] sm:$0xff]
        %v1825 = vld [vmem:[#allocation12 + $0x118] sm:$0xff]
        %v1826 = vld [vmem:[#allocation12 + $0x120] sm:$0xff]
        %v1827 = vld [vmem:[#allocation12 + $0x128] sm:$0xff]
        %v1828 = vld [vmem:[#allocation12 + $0x130] sm:$0xff]
        %v1829 = vld [vmem:[#allocation12 + $0x138] sm:$0xff]
        %v1830 = vld [vmem:[#allocation12 + $0x140] sm:$0xff]
        %v1831 = vld [vmem:[#allocation12 + $0x148] sm:$0xff]
        %v1832 = vld [vmem:[#allocation12 + $0x150] sm:$0xff]
        %v1833 = vld [vmem:[#allocation12 + $0x158] sm:$0xff]
        %v1834 = vld [vmem:[#allocation12 + $0x160] sm:$0xff]
        %v1835 = vld [vmem:[#allocation12 + $0x168] sm:$0xff]
        %v1836 = vld [vmem:[#allocation12 + $0x170] sm:$0xff]
        %v1837 = vld [vmem:[#allocation12 + $0x178] sm:$0xff]
        %v1838 = vld [vmem:[#allocation12 + $0x180] sm:$0xff]
        %v1839 = vld [vmem:[#allocation12 + $0x188] sm:$0xff]
        %v1840 = vld [vmem:[#allocation12 + $0x190] sm:$0xff]
        %v1841 = vld [vmem:[#allocation12 + $0x198] sm:$0xff]
        %v1842 = vld [vmem:[#allocation12 + $0x1a0] sm:$0xff]
        %v1843 = vld [vmem:[#allocation12 + $0x1a8] sm:$0xff]
        %v1844 = vld [vmem:[#allocation12 + $0x1b0] sm:$0xff]
        %v1845 = vld [vmem:[#allocation12 + $0x1b8] sm:$0xff]
        %v1846 = vld [vmem:[#allocation12 + $0x1c0] sm:$0xff]
        %v1847 = vld [vmem:[#allocation12 + $0x1c8] sm:$0xff]
        %v1848 = vld [vmem:[#allocation12 + $0x1d0] sm:$0xff]
        %v1849 = vld [vmem:[#allocation12 + $0x1d8] sm:$0xff]
        %v1850 = vld [vmem:[#allocation12 + $0x1e0] sm:$0xff]
        %v1851 = vld [vmem:[#allocation12 + $0x1e8] sm:$0xff]
        %v1852 = vld [vmem:[#allocation12 + $0x1f0] sm:$0xff]
        %v1853 = vld [vmem:[#allocation12 + $0x1f8] sm:$0xff]
        %v1854 = vld [vmem:[%s9] sm:$0xf]
        %v1856 = vlaneseq
        %v1857 = vshrl.u32 %v1856, 7
        %v1858 = vsub.s32 0, %v1857
        %v1859 = vrot.slane %v1854, %v1858
        %v1860 = vlaneseq
        %v1861 = vshrl.u32 %v1860, 7
        %v1862 = vsub.s32 1, %v1861
        %v1863 = vrot.slane %v1854, %v1862
        %v1864 = vlaneseq
        %v1865 = vshrl.u32 %v1864, 7
        %v1866 = vsub.s32 2, %v1865
        %v1867 = vrot.slane %v1854, %v1866
        %v1868 = vlaneseq
        %v1869 = vshrl.u32 %v1868, 7
        %v1870 = vsub.s32 3, %v1869
        %v1871 = vrot.slane %v1854, %v1870
        %v1940 = vunpack.c.l.b16 %v1790
        %v1941 = vunpack.c.h.b16 %v1790
        %v1942 = vunpack.c.l.b16 %v1791
        %v1943 = vunpack.c.h.b16 %v1791
        %v1944 = vunpack.c.l.b16 %v1792
        %v1945 = vunpack.c.h.b16 %v1792
        %v1946 = vunpack.c.l.b16 %v1793
        %v1947 = vunpack.c.h.b16 %v1793
        %v1948 = vunpack.c.l.b16 %v1794
        %v1949 = vunpack.c.h.b16 %v1794
        %v1950 = vunpack.c.l.b16 %v1795
        %v1951 = vunpack.c.h.b16 %v1795
        %v1952 = vunpack.c.l.b16 %v1796
        %v1953 = vunpack.c.h.b16 %v1796
        %v1954 = vunpack.c.l.b16 %v1797
        %v1955 = vunpack.c.h.b16 %v1797
        %v1956 = vunpack.c.l.b16 %v1798
        %v1957 = vunpack.c.h.b16 %v1798
        %v1958 = vunpack.c.l.b16 %v1799
        %v1959 = vunpack.c.h.b16 %v1799
        %v1960 = vunpack.c.l.b16 %v1800
        %v1961 = vunpack.c.h.b16 %v1800
        %v1962 = vunpack.c.l.b16 %v1801
        %v1963 = vunpack.c.h.b16 %v1801
        %v1964 = vunpack.c.l.b16 %v1802
        %v1965 = vunpack.c.h.b16 %v1802
        %v1966 = vunpack.c.l.b16 %v1803
        %v1967 = vunpack.c.h.b16 %v1803
        %v1968 = vunpack.c.l.b16 %v1804
        %v1969 = vunpack.c.h.b16 %v1804
        %v1970 = vunpack.c.l.b16 %v1805
        %v1971 = vunpack.c.h.b16 %v1805
        %v1972 = vunpack.c.l.b16 %v1806
        %v1973 = vunpack.c.h.b16 %v1806
        %v1974 = vunpack.c.l.b16 %v1807
        %v1975 = vunpack.c.h.b16 %v1807
        %v1976 = vunpack.c.l.b16 %v1808
        %v1977 = vunpack.c.h.b16 %v1808
        %v1978 = vunpack.c.l.b16 %v1809
        %v1979 = vunpack.c.h.b16 %v1809
        %v1980 = vunpack.c.l.b16 %v1810
        %v1981 = vunpack.c.h.b16 %v1810
        %v1982 = vunpack.c.l.b16 %v1811
        %v1983 = vunpack.c.h.b16 %v1811
        %v1984 = vunpack.c.l.b16 %v1812
        %v1985 = vunpack.c.h.b16 %v1812
        %v1986 = vunpack.c.l.b16 %v1813
        %v1987 = vunpack.c.h.b16 %v1813
        %v1988 = vunpack.c.l.b16 %v1814
        %v1989 = vunpack.c.h.b16 %v1814
        %v1990 = vunpack.c.l.b16 %v1815
        %v1991 = vunpack.c.h.b16 %v1815
        %v1992 = vunpack.c.l.b16 %v1816
        %v1993 = vunpack.c.h.b16 %v1816
        %v1994 = vunpack.c.l.b16 %v1817
        %v1995 = vunpack.c.h.b16 %v1817
        %v1996 = vunpack.c.l.b16 %v1818
        %v1997 = vunpack.c.h.b16 %v1818
        %v1998 = vunpack.c.l.b16 %v1819
        %v1999 = vunpack.c.h.b16 %v1819
        %v2000 = vunpack.c.l.b16 %v1820
        %v2001 = vunpack.c.h.b16 %v1820
        %v2002 = vunpack.c.l.b16 %v1821
        %v2003 = vunpack.c.h.b16 %v1821
        %v2004 = vunpack.c.l.b16 %v1822
        %v2005 = vunpack.c.h.b16 %v1822
        %v2006 = vunpack.c.l.b16 %v1823
        %v2007 = vunpack.c.h.b16 %v1823
        %v2008 = vunpack.c.l.b16 %v1824
        %v2009 = vunpack.c.h.b16 %v1824
        %v2010 = vunpack.c.l.b16 %v1825
        %v2011 = vunpack.c.h.b16 %v1825
        %v2012 = vunpack.c.l.b16 %v1826
        %v2013 = vunpack.c.h.b16 %v1826
        %v2014 = vunpack.c.l.b16 %v1827
        %v2015 = vunpack.c.h.b16 %v1827
        %v2016 = vunpack.c.l.b16 %v1828
        %v2017 = vunpack.c.h.b16 %v1828
        %v2018 = vunpack.c.l.b16 %v1829
        %v2019 = vunpack.c.h.b16 %v1829
        %v2020 = vunpack.c.l.b16 %v1830
        %v2021 = vunpack.c.h.b16 %v1830
        %v2022 = vunpack.c.l.b16 %v1831
        %v2023 = vunpack.c.h.b16 %v1831
        %v2024 = vunpack.c.l.b16 %v1832
        %v2025 = vunpack.c.h.b16 %v1832
        %v2026 = vunpack.c.l.b16 %v1833
        %v2027 = vunpack.c.h.b16 %v1833
        %v2028 = vunpack.c.l.b16 %v1834
        %v2029 = vunpack.c.h.b16 %v1834
        %v2030 = vunpack.c.l.b16 %v1835
        %v2031 = vunpack.c.h.b16 %v1835
        %v2032 = vunpack.c.l.b16 %v1836
        %v2033 = vunpack.c.h.b16 %v1836
        %v2034 = vunpack.c.l.b16 %v1837
        %v2035 = vunpack.c.h.b16 %v1837
        %v2036 = vunpack.c.l.b16 %v1838
        %v2037 = vunpack.c.h.b16 %v1838
        %v2038 = vunpack.c.l.b16 %v1839
        %v2039 = vunpack.c.h.b16 %v1839
        %v2040 = vunpack.c.l.b16 %v1840
        %v2041 = vunpack.c.h.b16 %v1840
        %v2042 = vunpack.c.l.b16 %v1841
        %v2043 = vunpack.c.h.b16 %v1841
        %v2044 = vunpack.c.l.b16 %v1842
        %v2045 = vunpack.c.h.b16 %v1842
        %v2046 = vunpack.c.l.b16 %v1843
        %v2047 = vunpack.c.h.b16 %v1843
        %v2048 = vunpack.c.l.b16 %v1844
        %v2049 = vunpack.c.h.b16 %v1844
        %v2050 = vunpack.c.l.b16 %v1845
        %v2051 = vunpack.c.h.b16 %v1845
        %v2052 = vunpack.c.l.b16 %v1846
        %v2053 = vunpack.c.h.b16 %v1846
        %v2054 = vunpack.c.l.b16 %v1847
        %v2055 = vunpack.c.h.b16 %v1847
        %v2056 = vunpack.c.l.b16 %v1848
        %v2057 = vunpack.c.h.b16 %v1848
        %v2058 = vunpack.c.l.b16 %v1849
        %v2059 = vunpack.c.h.b16 %v1849
        %v2060 = vunpack.c.l.b16 %v1850
        %v2061 = vunpack.c.h.b16 %v1850
        %v2062 = vunpack.c.l.b16 %v1851
        %v2063 = vunpack.c.h.b16 %v1851
        %v2064 = vunpack.c.l.b16 %v1852
        %v2065 = vunpack.c.h.b16 %v1852
        %v2066 = vunpack.c.l.b16 %v1853
        %v2067 = vunpack.c.h.b16 %v1853
        %v2068 = vpack.c.b16 %v1944, %v1940
        %v2069 = vpack.c.b16 %v1945, %v1941
        %v2070 = vpack.c.b16 %v1946, %v1942
        %v2071 = vpack.c.b16 %v1947, %v1943
        %v2072 = vpack.c.b16 %v1952, %v1948
        %v2073 = vpack.c.b16 %v1953, %v1949
        %v2074 = vpack.c.b16 %v1954, %v1950
        %v2075 = vpack.c.b16 %v1955, %v1951
        %v2076 = vpack.c.b16 %v1960, %v1956
        %v2077 = vpack.c.b16 %v1961, %v1957
        %v2078 = vpack.c.b16 %v1962, %v1958
        %v2079 = vpack.c.b16 %v1963, %v1959
        %v2080 = vpack.c.b16 %v1968, %v1964
        %v2081 = vpack.c.b16 %v1969, %v1965
        %v2082 = vpack.c.b16 %v1970, %v1966
        %v2083 = vpack.c.b16 %v1971, %v1967
        %v2084 = vpack.c.b16 %v1976, %v1972
        %v2085 = vpack.c.b16 %v1977, %v1973
        %v2086 = vpack.c.b16 %v1978, %v1974
        %v2087 = vpack.c.b16 %v1979, %v1975
        %v2088 = vpack.c.b16 %v1984, %v1980
        %v2089 = vpack.c.b16 %v1985, %v1981
        %v2090 = vpack.c.b16 %v1986, %v1982
        %v2091 = vpack.c.b16 %v1987, %v1983
        %v2092 = vpack.c.b16 %v1992, %v1988
        %v2093 = vpack.c.b16 %v1993, %v1989
        %v2094 = vpack.c.b16 %v1994, %v1990
        %v2095 = vpack.c.b16 %v1995, %v1991
        %v2096 = vpack.c.b16 %v2000, %v1996
        %v2097 = vpack.c.b16 %v2001, %v1997
        %v2098 = vpack.c.b16 %v2002, %v1998
        %v2099 = vpack.c.b16 %v2003, %v1999
        %v2100 = vpack.c.b16 %v2008, %v2004
        %v2101 = vpack.c.b16 %v2009, %v2005
        %v2102 = vpack.c.b16 %v2010, %v2006
        %v2103 = vpack.c.b16 %v2011, %v2007
        %v2104 = vpack.c.b16 %v2016, %v2012
        %v2105 = vpack.c.b16 %v2017, %v2013
        %v2106 = vpack.c.b16 %v2018, %v2014
        %v2107 = vpack.c.b16 %v2019, %v2015
        %v2108 = vpack.c.b16 %v2024, %v2020
        %v2109 = vpack.c.b16 %v2025, %v2021
        %v2110 = vpack.c.b16 %v2026, %v2022
        %v2111 = vpack.c.b16 %v2027, %v2023
        %v2112 = vpack.c.b16 %v2032, %v2028
        %v2113 = vpack.c.b16 %v2033, %v2029
        %v2114 = vpack.c.b16 %v2034, %v2030
        %v2115 = vpack.c.b16 %v2035, %v2031
        %v2116 = vpack.c.b16 %v2040, %v2036
        %v2117 = vpack.c.b16 %v2041, %v2037
        %v2118 = vpack.c.b16 %v2042, %v2038
        %v2119 = vpack.c.b16 %v2043, %v2039
        %v2120 = vpack.c.b16 %v2048, %v2044
        %v2121 = vpack.c.b16 %v2049, %v2045
        %v2122 = vpack.c.b16 %v2050, %v2046
        %v2123 = vpack.c.b16 %v2051, %v2047
        %v2124 = vpack.c.b16 %v2056, %v2052
        %v2125 = vpack.c.b16 %v2057, %v2053
        %v2126 = vpack.c.b16 %v2058, %v2054
        %v2127 = vpack.c.b16 %v2059, %v2055
        %v2128 = vpack.c.b16 %v2064, %v2060
        %v2129 = vpack.c.b16 %v2065, %v2061
        %v2130 = vpack.c.b16 %v2066, %v2062
        %v2131 = vpack.c.b16 %v2067, %v2063
        %2196 = vmatprep.subr.bf16.mxu0 %v2069
        %2197 = vmatpush1.bf16.msra.mxu0 %v2068
        %2198 = vmatprep.subr.bf16.mxu0 %v2073
        %2199 = vmatpush1.bf16.msra.mxu0 %v2072
        %2200 = vmatprep.subr.bf16.mxu0 %v2077
        %2201 = vmatpush1.bf16.msra.mxu0 %v2076
        %2202 = vmatprep.subr.bf16.mxu0 %v2081
        %2203 = vmatpush1.bf16.msra.mxu0 %v2080
        %2204 = vmatprep.subr.bf16.mxu0 %v2085
        %2205 = vmatpush1.bf16.msra.mxu0 %v2084
        %2206 = vmatprep.subr.bf16.mxu0 %v2089
        %2207 = vmatpush1.bf16.msra.mxu0 %v2088
        %2208 = vmatprep.subr.bf16.mxu0 %v2093
        %2209 = vmatpush1.bf16.msra.mxu0 %v2092
        %2210 = vmatprep.subr.bf16.mxu0 %v2097
        %2211 = vmatpush1.bf16.msra.mxu0 %v2096
        %2212 = vmatprep.subr.bf16.mxu0 %v2101
        %2213 = vmatpush1.bf16.msra.mxu0 %v2100
        %2214 = vmatprep.subr.bf16.mxu0 %v2105
        %2215 = vmatpush1.bf16.msra.mxu0 %v2104
        %2216 = vmatprep.subr.bf16.mxu0 %v2109
        %2217 = vmatpush1.bf16.msra.mxu0 %v2108
        %2218 = vmatprep.subr.bf16.mxu0 %v2113
        %2219 = vmatpush1.bf16.msra.mxu0 %v2112
        %2220 = vmatprep.subr.bf16.mxu0 %v2117
        %2221 = vmatpush1.bf16.msra.mxu0 %v2116
        %2222 = vmatprep.subr.bf16.mxu0 %v2121
        %2223 = vmatpush1.bf16.msra.mxu0 %v2120
        %2224 = vmatprep.subr.bf16.mxu0 %v2125
        %2225 = vmatpush1.bf16.msra.mxu0 %v2124
        %2226 = vmatprep.subr.bf16.mxu0 %v2129
        %2227 = vmatpush1.bf16.msra.mxu0 %v2128
        %2228 = vmatprep.mubr.bf16.mxu0 %v1789
        %2229 = vmatmul.mubr.bf16.gmra.mrb[0].mxu0 %v1788
        %v2230 = vpop.f32.mrb[0].mxu0
        %v2231 = vadd.f32 %v1859, %v2230
        %v2232 = vpop.f32.mrb[0].mxu0
        %v2233 = vadd.f32 %v1863, %v2232
        %v2234 = vpop.f32.mrb[0].mxu0
        %v2235 = vpop.f32.mrb[0].mxu0
        %2236 = vdwg.mxu0
        %2237 = vmatprep.subr.bf16.mxu0 %v2071
        %2238 = vmatpush1.bf16.msra.mxu0 %v2070
        %2239 = vmatprep.subr.bf16.mxu0 %v2075
        %2240 = vmatpush1.bf16.msra.mxu0 %v2074
        %2241 = vmatprep.subr.bf16.mxu0 %v2079
        %2242 = vmatpush1.bf16.msra.mxu0 %v2078
        %2243 = vmatprep.subr.bf16.mxu0 %v2083
        %2244 = vmatpush1.bf16.msra.mxu0 %v2082
        %2245 = vmatprep.subr.bf16.mxu0 %v2087
        %2246 = vmatpush1.bf16.msra.mxu0 %v2086
        %2247 = vmatprep.subr.bf16.mxu0 %v2091
        %2248 = vmatpush1.bf16.msra.mxu0 %v2090
        %2249 = vmatprep.subr.bf16.mxu0 %v2095
        %2250 = vmatpush1.bf16.msra.mxu0 %v2094
        %2251 = vmatprep.subr.bf16.mxu0 %v2099
        %2252 = vmatpush1.bf16.msra.mxu0 %v2098
        %2253 = vmatprep.subr.bf16.mxu0 %v2103
        %2254 = vmatpush1.bf16.msra.mxu0 %v2102
        %2255 = vmatprep.subr.bf16.mxu0 %v2107
        %2256 = vmatpush1.bf16.msra.mxu0 %v2106
        %2257 = vmatprep.subr.bf16.mxu0 %v2111
        %2258 = vmatpush1.bf16.msra.mxu0 %v2110
        %2259 = vmatprep.subr.bf16.mxu0 %v2115
        %2260 = vmatpush1.bf16.msra.mxu0 %v2114
        %2261 = vmatprep.subr.bf16.mxu0 %v2119
        %2262 = vmatpush1.bf16.msra.mxu0 %v2118
        %2263 = vmatprep.subr.bf16.mxu0 %v2123
        %2264 = vmatpush1.bf16.msra.mxu0 %v2122
        %2265 = vmatprep.subr.bf16.mxu0 %v2127
        %2266 = vmatpush1.bf16.msra.mxu0 %v2126
        %2267 = vmatprep.subr.bf16.mxu0 %v2131
        %2268 = vmatpush1.bf16.msra.mxu0 %v2130
        %2269 = vmatprep.mubr.bf16.mxu0 %v1789
        %2270 = vmatmul.mubr.bf16.gmra.mrb[0].mxu0 %v1788
        %v2271 = vpop.f32.mrb[0].mxu0
        %v2272 = vadd.f32 %v1867, %v2271
        %v2273 = vpop.f32.mrb[0].mxu0
        %v2274 = vadd.f32 %v1871, %v2273
        %v2275 = vpop.f32.mrb[0].mxu0
        %v2276 = vpop.f32.mrb[0].mxu0
        %2277 = vdwg.mxu0
        %v2278 = vmax.f32 %v2231, 0.0
        %v2279 = vmax.f32 %v2233, 0.0
        %v2280 = vmax.f32 %v2272, 0.0
        %v2281 = vmax.f32 %v2274, 0.0
        %v2282 = vpack.c.bf16 %v2278, %v2278
        %v2283 = vpack.c.bf16 %v2279, %v2279
        %v2284 = vpack.c.bf16 %v2280, %v2280
        %v2285 = vpack.c.bf16 %v2281, %v2281
        %v2286 = vld [vmem:[#allocation13] sm:$0xff]
        %v2287 = vld [vmem:[#allocation13 + $0x8] sm:$0xff]
        %v2288 = vld [vmem:[#allocation13 + $0x10] sm:$0xff]
        %v2289 = vld [vmem:[#allocation13 + $0x18] sm:$0xff]
        %v2290 = vld [vmem:[#allocation13 + $0x20] sm:$0xff]
        %v2291 = vld [vmem:[#allocation13 + $0x28] sm:$0xff]
        %v2292 = vld [vmem:[#allocation13 + $0x30] sm:$0xff]
        %v2293 = vld [vmem:[#allocation13 + $0x38] sm:$0xff]
        %v2294 = vld [vmem:[#allocation13 + $0x40] sm:$0xff]
        %v2295 = vld [vmem:[#allocation13 + $0x48] sm:$0xff]
        %v2296 = vld [vmem:[#allocation13 + $0x50] sm:$0xff]
        %v2297 = vld [vmem:[#allocation13 + $0x58] sm:$0xff]
        %v2298 = vld [vmem:[#allocation13 + $0x60] sm:$0xff]
        %v2299 = vld [vmem:[#allocation13 + $0x68] sm:$0xff]
        %v2300 = vld [vmem:[#allocation13 + $0x70] sm:$0xff]
        %v2301 = vld [vmem:[#allocation13 + $0x78] sm:$0xff]
        %v2302 = vld [vmem:[#allocation13 + $0x80] sm:$0xff]
        %v2303 = vld [vmem:[#allocation13 + $0x88] sm:$0xff]
        %v2304 = vld [vmem:[#allocation13 + $0x90] sm:$0xff]
        %v2305 = vld [vmem:[#allocation13 + $0x98] sm:$0xff]
        %v2306 = vld [vmem:[#allocation13 + $0xa0] sm:$0xff]
        %v2307 = vld [vmem:[#allocation13 + $0xa8] sm:$0xff]
        %v2308 = vld [vmem:[#allocation13 + $0xb0] sm:$0xff]
        %v2309 = vld [vmem:[#allocation13 + $0xb8] sm:$0xff]
        %v2310 = vld [vmem:[#allocation13 + $0xc0] sm:$0xff]
        %v2311 = vld [vmem:[#allocation13 + $0xc8] sm:$0xff]
        %v2312 = vld [vmem:[#allocation13 + $0xd0] sm:$0xff]
        %v2313 = vld [vmem:[#allocation13 + $0xd8] sm:$0xff]
        %v2314 = vld [vmem:[#allocation13 + $0xe0] sm:$0xff]
        %v2315 = vld [vmem:[#allocation13 + $0xe8] sm:$0xff]
        %v2316 = vld [vmem:[#allocation13 + $0xf0] sm:$0xff]
        %v2317 = vld [vmem:[#allocation13 + $0xf8] sm:$0xff]
        %v2318 = vld [vmem:[#allocation13 + $0x100] sm:$0xff]
        %v2319 = vld [vmem:[#allocation13 + $0x108] sm:$0xff]
        %v2320 = vld [vmem:[#allocation13 + $0x110] sm:$0xff]
        %v2321 = vld [vmem:[#allocation13 + $0x118] sm:$0xff]
        %v2322 = vld [vmem:[#allocation13 + $0x120] sm:$0xff]
        %v2323 = vld [vmem:[#allocation13 + $0x128] sm:$0xff]
        %v2324 = vld [vmem:[#allocation13 + $0x130] sm:$0xff]
        %v2325 = vld [vmem:[#allocation13 + $0x138] sm:$0xff]
        %v2326 = vld [vmem:[#allocation13 + $0x140] sm:$0xff]
        %v2327 = vld [vmem:[#allocation13 + $0x148] sm:$0xff]
        %v2328 = vld [vmem:[#allocation13 + $0x150] sm:$0xff]
        %v2329 = vld [vmem:[#allocation13 + $0x158] sm:$0xff]
        %v2330 = vld [vmem:[#allocation13 + $0x160] sm:$0xff]
        %v2331 = vld [vmem:[#allocation13 + $0x168] sm:$0xff]
        %v2332 = vld [vmem:[#allocation13 + $0x170] sm:$0xff]
        %v2333 = vld [vmem:[#allocation13 + $0x178] sm:$0xff]
        %v2334 = vld [vmem:[#allocation13 + $0x180] sm:$0xff]
        %v2335 = vld [vmem:[#allocation13 + $0x188] sm:$0xff]
        %v2336 = vld [vmem:[#allocation13 + $0x190] sm:$0xff]
        %v2337 = vld [vmem:[#allocation13 + $0x198] sm:$0xff]
        %v2338 = vld [vmem:[#allocation13 + $0x1a0] sm:$0xff]
        %v2339 = vld [vmem:[#allocation13 + $0x1a8] sm:$0xff]
        %v2340 = vld [vmem:[#allocation13 + $0x1b0] sm:$0xff]
        %v2341 = vld [vmem:[#allocation13 + $0x1b8] sm:$0xff]
        %v2342 = vld [vmem:[#allocation13 + $0x1c0] sm:$0xff]
        %v2343 = vld [vmem:[#allocation13 + $0x1c8] sm:$0xff]
        %v2344 = vld [vmem:[#allocation13 + $0x1d0] sm:$0xff]
        %v2345 = vld [vmem:[#allocation13 + $0x1d8] sm:$0xff]
        %v2346 = vld [vmem:[#allocation13 + $0x1e0] sm:$0xff]
        %v2347 = vld [vmem:[#allocation13 + $0x1e8] sm:$0xff]
        %v2348 = vld [vmem:[#allocation13 + $0x1f0] sm:$0xff]
        %v2349 = vld [vmem:[#allocation13 + $0x1f8] sm:$0xff]
        %v2350 = vld [vmem:[#allocation15] sm:$0x3]
        %v2352 = vlaneseq
        %v2353 = vshrl.u32 %v2352, 7
        %v2354 = vsub.s32 0, %v2353
        %v2355 = vrot.slane %v2350, %v2354
        %v2356 = vlaneseq
        %v2357 = vshrl.u32 %v2356, 7
        %v2358 = vsub.s32 1, %v2357
        %v2359 = vrot.slane %v2350, %v2358
        %v2426 = vunpack.c.l.b16 %v2286
        %v2427 = vunpack.c.h.b16 %v2286
        %v2428 = vunpack.c.l.b16 %v2287
        %v2429 = vunpack.c.h.b16 %v2287
        %v2430 = vunpack.c.l.b16 %v2288
        %v2431 = vunpack.c.h.b16 %v2288
        %v2432 = vunpack.c.l.b16 %v2289
        %v2433 = vunpack.c.h.b16 %v2289
        %v2434 = vunpack.c.l.b16 %v2290
        %v2435 = vunpack.c.h.b16 %v2290
        %v2436 = vunpack.c.l.b16 %v2291
        %v2437 = vunpack.c.h.b16 %v2291
        %v2438 = vunpack.c.l.b16 %v2292
        %v2439 = vunpack.c.h.b16 %v2292
        %v2440 = vunpack.c.l.b16 %v2293
        %v2441 = vunpack.c.h.b16 %v2293
        %v2442 = vunpack.c.l.b16 %v2294
        %v2443 = vunpack.c.h.b16 %v2294
        %v2444 = vunpack.c.l.b16 %v2295
        %v2445 = vunpack.c.h.b16 %v2295
        %v2446 = vunpack.c.l.b16 %v2296
        %v2447 = vunpack.c.h.b16 %v2296
        %v2448 = vunpack.c.l.b16 %v2297
        %v2449 = vunpack.c.h.b16 %v2297
        %v2450 = vunpack.c.l.b16 %v2298
        %v2451 = vunpack.c.h.b16 %v2298
        %v2452 = vunpack.c.l.b16 %v2299
        %v2453 = vunpack.c.h.b16 %v2299
        %v2454 = vunpack.c.l.b16 %v2300
        %v2455 = vunpack.c.h.b16 %v2300
        %v2456 = vunpack.c.l.b16 %v2301
        %v2457 = vunpack.c.h.b16 %v2301
        %v2458 = vunpack.c.l.b16 %v2302
        %v2459 = vunpack.c.h.b16 %v2302
        %v2460 = vunpack.c.l.b16 %v2303
        %v2461 = vunpack.c.h.b16 %v2303
        %v2462 = vunpack.c.l.b16 %v2304
        %v2463 = vunpack.c.h.b16 %v2304
        %v2464 = vunpack.c.l.b16 %v2305
        %v2465 = vunpack.c.h.b16 %v2305
        %v2466 = vunpack.c.l.b16 %v2306
        %v2467 = vunpack.c.h.b16 %v2306
        %v2468 = vunpack.c.l.b16 %v2307
        %v2469 = vunpack.c.h.b16 %v2307
        %v2470 = vunpack.c.l.b16 %v2308
        %v2471 = vunpack.c.h.b16 %v2308
        %v2472 = vunpack.c.l.b16 %v2309
        %v2473 = vunpack.c.h.b16 %v2309
        %v2474 = vunpack.c.l.b16 %v2310
        %v2475 = vunpack.c.h.b16 %v2310
        %v2476 = vunpack.c.l.b16 %v2311
        %v2477 = vunpack.c.h.b16 %v2311
        %v2478 = vunpack.c.l.b16 %v2312
        %v2479 = vunpack.c.h.b16 %v2312
        %v2480 = vunpack.c.l.b16 %v2313
        %v2481 = vunpack.c.h.b16 %v2313
        %v2482 = vunpack.c.l.b16 %v2314
        %v2483 = vunpack.c.h.b16 %v2314
        %v2484 = vunpack.c.l.b16 %v2315
        %v2485 = vunpack.c.h.b16 %v2315
        %v2486 = vunpack.c.l.b16 %v2316
        %v2487 = vunpack.c.h.b16 %v2316
        %v2488 = vunpack.c.l.b16 %v2317
        %v2489 = vunpack.c.h.b16 %v2317
        %v2490 = vunpack.c.l.b16 %v2318
        %v2491 = vunpack.c.h.b16 %v2318
        %v2492 = vunpack.c.l.b16 %v2319
        %v2493 = vunpack.c.h.b16 %v2319
        %v2494 = vunpack.c.l.b16 %v2320
        %v2495 = vunpack.c.h.b16 %v2320
        %v2496 = vunpack.c.l.b16 %v2321
        %v2497 = vunpack.c.h.b16 %v2321
        %v2498 = vunpack.c.l.b16 %v2322
        %v2499 = vunpack.c.h.b16 %v2322
        %v2500 = vunpack.c.l.b16 %v2323
        %v2501 = vunpack.c.h.b16 %v2323
        %v2502 = vunpack.c.l.b16 %v2324
        %v2503 = vunpack.c.h.b16 %v2324
        %v2504 = vunpack.c.l.b16 %v2325
        %v2505 = vunpack.c.h.b16 %v2325
        %v2506 = vunpack.c.l.b16 %v2326
        %v2507 = vunpack.c.h.b16 %v2326
        %v2508 = vunpack.c.l.b16 %v2327
        %v2509 = vunpack.c.h.b16 %v2327
        %v2510 = vunpack.c.l.b16 %v2328
        %v2511 = vunpack.c.h.b16 %v2328
        %v2512 = vunpack.c.l.b16 %v2329
        %v2513 = vunpack.c.h.b16 %v2329
        %v2514 = vunpack.c.l.b16 %v2330
        %v2515 = vunpack.c.h.b16 %v2330
        %v2516 = vunpack.c.l.b16 %v2331
        %v2517 = vunpack.c.h.b16 %v2331
        %v2518 = vunpack.c.l.b16 %v2332
        %v2519 = vunpack.c.h.b16 %v2332
        %v2520 = vunpack.c.l.b16 %v2333
        %v2521 = vunpack.c.h.b16 %v2333
        %v2522 = vunpack.c.l.b16 %v2334
        %v2523 = vunpack.c.h.b16 %v2334
        %v2524 = vunpack.c.l.b16 %v2335
        %v2525 = vunpack.c.h.b16 %v2335
        %v2526 = vunpack.c.l.b16 %v2336
        %v2527 = vunpack.c.h.b16 %v2336
        %v2528 = vunpack.c.l.b16 %v2337
        %v2529 = vunpack.c.h.b16 %v2337
        %v2530 = vunpack.c.l.b16 %v2338
        %v2531 = vunpack.c.h.b16 %v2338
        %v2532 = vunpack.c.l.b16 %v2339
        %v2533 = vunpack.c.h.b16 %v2339
        %v2534 = vunpack.c.l.b16 %v2340
        %v2535 = vunpack.c.h.b16 %v2340
        %v2536 = vunpack.c.l.b16 %v2341
        %v2537 = vunpack.c.h.b16 %v2341
        %v2538 = vunpack.c.l.b16 %v2342
        %v2539 = vunpack.c.h.b16 %v2342
        %v2540 = vunpack.c.l.b16 %v2343
        %v2541 = vunpack.c.h.b16 %v2343
        %v2542 = vunpack.c.l.b16 %v2344
        %v2543 = vunpack.c.h.b16 %v2344
        %v2544 = vunpack.c.l.b16 %v2345
        %v2545 = vunpack.c.h.b16 %v2345
        %v2546 = vunpack.c.l.b16 %v2346
        %v2547 = vunpack.c.h.b16 %v2346
        %v2548 = vunpack.c.l.b16 %v2347
        %v2549 = vunpack.c.h.b16 %v2347
        %v2550 = vunpack.c.l.b16 %v2348
        %v2551 = vunpack.c.h.b16 %v2348
        %v2552 = vunpack.c.l.b16 %v2349
        %v2553 = vunpack.c.h.b16 %v2349
        %v2554 = vpack.c.b16 %v2428, %v2426
        %v2555 = vpack.c.b16 %v2429, %v2427
        %v2556 = vpack.c.b16 %v2432, %v2430
        %v2557 = vpack.c.b16 %v2433, %v2431
        %v2558 = vpack.c.b16 %v2436, %v2434
        %v2559 = vpack.c.b16 %v2437, %v2435
        %v2560 = vpack.c.b16 %v2440, %v2438
        %v2561 = vpack.c.b16 %v2441, %v2439
        %v2562 = vpack.c.b16 %v2444, %v2442
        %v2563 = vpack.c.b16 %v2445, %v2443
        %v2564 = vpack.c.b16 %v2448, %v2446
        %v2565 = vpack.c.b16 %v2449, %v2447
        %v2566 = vpack.c.b16 %v2452, %v2450
        %v2567 = vpack.c.b16 %v2453, %v2451
        %v2568 = vpack.c.b16 %v2456, %v2454
        %v2569 = vpack.c.b16 %v2457, %v2455
        %v2570 = vpack.c.b16 %v2460, %v2458
        %v2571 = vpack.c.b16 %v2461, %v2459
        %v2572 = vpack.c.b16 %v2464, %v2462
        %v2573 = vpack.c.b16 %v2465, %v2463
        %v2574 = vpack.c.b16 %v2468, %v2466
        %v2575 = vpack.c.b16 %v2469, %v2467
        %v2576 = vpack.c.b16 %v2472, %v2470
        %v2577 = vpack.c.b16 %v2473, %v2471
        %v2578 = vpack.c.b16 %v2476, %v2474
        %v2579 = vpack.c.b16 %v2477, %v2475
        %v2580 = vpack.c.b16 %v2480, %v2478
        %v2581 = vpack.c.b16 %v2481, %v2479
        %v2582 = vpack.c.b16 %v2484, %v2482
        %v2583 = vpack.c.b16 %v2485, %v2483
        %v2584 = vpack.c.b16 %v2488, %v2486
        %v2585 = vpack.c.b16 %v2489, %v2487
        %v2586 = vpack.c.b16 %v2492, %v2490
        %v2587 = vpack.c.b16 %v2493, %v2491
        %v2588 = vpack.c.b16 %v2496, %v2494
        %v2589 = vpack.c.b16 %v2497, %v2495
        %v2590 = vpack.c.b16 %v2500, %v2498
        %v2591 = vpack.c.b16 %v2501, %v2499
        %v2592 = vpack.c.b16 %v2504, %v2502
        %v2593 = vpack.c.b16 %v2505, %v2503
        %v2594 = vpack.c.b16 %v2508, %v2506
        %v2595 = vpack.c.b16 %v2509, %v2507
        %v2596 = vpack.c.b16 %v2512, %v2510
        %v2597 = vpack.c.b16 %v2513, %v2511
        %v2598 = vpack.c.b16 %v2516, %v2514
        %v2599 = vpack.c.b16 %v2517, %v2515
        %v2600 = vpack.c.b16 %v2520, %v2518
        %v2601 = vpack.c.b16 %v2521, %v2519
        %v2602 = vpack.c.b16 %v2524, %v2522
        %v2603 = vpack.c.b16 %v2525, %v2523
        %v2604 = vpack.c.b16 %v2528, %v2526
        %v2605 = vpack.c.b16 %v2529, %v2527
        %v2606 = vpack.c.b16 %v2532, %v2530
        %v2607 = vpack.c.b16 %v2533, %v2531
        %v2608 = vpack.c.b16 %v2536, %v2534
        %v2609 = vpack.c.b16 %v2537, %v2535
        %v2610 = vpack.c.b16 %v2540, %v2538
        %v2611 = vpack.c.b16 %v2541, %v2539
        %v2612 = vpack.c.b16 %v2544, %v2542
        %v2613 = vpack.c.b16 %v2545, %v2543
        %v2614 = vpack.c.b16 %v2548, %v2546
        %v2615 = vpack.c.b16 %v2549, %v2547
        %v2616 = vpack.c.b16 %v2552, %v2550
        %v2617 = vpack.c.b16 %v2553, %v2551
        %2682 = vmatprep.subr.bf16.mxu0 %v2555
        %2683 = vmatpush1.bf16.msra.mxu0 %v2554
        %2684 = vmatprep.subr.bf16.mxu0 %v2557
        %2685 = vmatpush1.bf16.msra.mxu0 %v2556
        %2686 = vmatprep.subr.bf16.mxu0 %v2559
        %2687 = vmatpush1.bf16.msra.mxu0 %v2558
        %2688 = vmatprep.subr.bf16.mxu0 %v2561
        %2689 = vmatpush1.bf16.msra.mxu0 %v2560
        %2690 = vmatprep.subr.bf16.mxu0 %v2563
        %2691 = vmatpush1.bf16.msra.mxu0 %v2562
        %2692 = vmatprep.subr.bf16.mxu0 %v2565
        %2693 = vmatpush1.bf16.msra.mxu0 %v2564
        %2694 = vmatprep.subr.bf16.mxu0 %v2567
        %2695 = vmatpush1.bf16.msra.mxu0 %v2566
        %2696 = vmatprep.subr.bf16.mxu0 %v2569
        %2697 = vmatpush1.bf16.msra.mxu0 %v2568
        %2698 = vmatprep.subr.bf16.mxu0 %v2571
        %2699 = vmatpush1.bf16.msra.mxu0 %v2570
        %2700 = vmatprep.subr.bf16.mxu0 %v2573
        %2701 = vmatpush1.bf16.msra.mxu0 %v2572
        %2702 = vmatprep.subr.bf16.mxu0 %v2575
        %2703 = vmatpush1.bf16.msra.mxu0 %v2574
        %2704 = vmatprep.subr.bf16.mxu0 %v2577
        %2705 = vmatpush1.bf16.msra.mxu0 %v2576
        %2706 = vmatprep.subr.bf16.mxu0 %v2579
        %2707 = vmatpush1.bf16.msra.mxu0 %v2578
        %2708 = vmatprep.subr.bf16.mxu0 %v2581
        %2709 = vmatpush1.bf16.msra.mxu0 %v2580
        %2710 = vmatprep.subr.bf16.mxu0 %v2583
        %2711 = vmatpush1.bf16.msra.mxu0 %v2582
        %2712 = vmatprep.subr.bf16.mxu0 %v2585
        %2713 = vmatpush1.bf16.msra.mxu0 %v2584
        %2714 = vmatprep.mubr.bf16.mxu0 %v2283
        %2715 = vmatmul.mubr.bf16.gmra.mrb[0].mxu0 %v2282
        %v2716 = vpop.f32.mrb[0].mxu0
        %v2717 = vadd.f32 %v2355, %v2716
        %v2718 = vpop.f32.mrb[0].mxu0
        %v2719 = vadd.f32 %v2359, %v2718
        %v2720 = vpop.f32.mrb[0].mxu0
        %v2721 = vpop.f32.mrb[0].mxu0
        %2722 = vdwg.mxu0
        %2723 = vmatprep.subr.bf16.mxu0 %v2587
        %2724 = vmatpush1.bf16.msra.mxu0 %v2586
        %2725 = vmatprep.subr.bf16.mxu0 %v2589
        %2726 = vmatpush1.bf16.msra.mxu0 %v2588
        %2727 = vmatprep.subr.bf16.mxu0 %v2591
        %2728 = vmatpush1.bf16.msra.mxu0 %v2590
        %2729 = vmatprep.subr.bf16.mxu0 %v2593
        %2730 = vmatpush1.bf16.msra.mxu0 %v2592
        %2731 = vmatprep.subr.bf16.mxu0 %v2595
        %2732 = vmatpush1.bf16.msra.mxu0 %v2594
        %2733 = vmatprep.subr.bf16.mxu0 %v2597
        %2734 = vmatpush1.bf16.msra.mxu0 %v2596
        %2735 = vmatprep.subr.bf16.mxu0 %v2599
        %2736 = vmatpush1.bf16.msra.mxu0 %v2598
        %2737 = vmatprep.subr.bf16.mxu0 %v2601
        %2738 = vmatpush1.bf16.msra.mxu0 %v2600
        %2739 = vmatprep.subr.bf16.mxu0 %v2603
        %2740 = vmatpush1.bf16.msra.mxu0 %v2602
        %2741 = vmatprep.subr.bf16.mxu0 %v2605
        %2742 = vmatpush1.bf16.msra.mxu0 %v2604
        %2743 = vmatprep.subr.bf16.mxu0 %v2607
        %2744 = vmatpush1.bf16.msra.mxu0 %v2606
        %2745 = vmatprep.subr.bf16.mxu0 %v2609
        %2746 = vmatpush1.bf16.msra.mxu0 %v2608
        %2747 = vmatprep.subr.bf16.mxu0 %v2611
        %2748 = vmatpush1.bf16.msra.mxu0 %v2610
        %2749 = vmatprep.subr.bf16.mxu0 %v2613
        %2750 = vmatpush1.bf16.msra.mxu0 %v2612
        %2751 = vmatprep.subr.bf16.mxu0 %v2615
        %2752 = vmatpush1.bf16.msra.mxu0 %v2614
        %2753 = vmatprep.subr.bf16.mxu0 %v2617
        %2754 = vmatpush1.bf16.msra.mxu0 %v2616
        %2755 = vmatprep.mubr.bf16.mxu0 %v2285
        %2756 = vmatmul.mubr.bf16.gmra.mrb[0].mxu0 %v2284
        %v2757 = vpop.f32.mrb[0].mxu0
        %v2758 = vadd.f32 %v2717, %v2757
        %v2759 = vpop.f32.mrb[0].mxu0
        %v2760 = vadd.f32 %v2719, %v2759
        %v2761 = vpop.f32.mrb[0].mxu0
        %v2762 = vpop.f32.mrb[0].mxu0
        %2763 = vdwg.mxu0
        %v2764 = vadd.f32 %v2758, %v1786
        %v2765 = vadd.f32 %v2760, %v1787
        %v2766 = vld [vmem:[%s12] sm:$0x3]
        %v2767 = vld [vmem:[%s13] sm:$0x3]
        %v2768 = vadd.f32 %v2764, %v2765
        %2769 = vadd.xlane.f32.xlu0 %v2768
        %v2770 = vpop.xlane.xlu0 %2769
        %v2771 = vmul.f32 %v2770, %v1748
        %v2772 = vsub.f32 %v2764, %v2771
        %v2773 = vsub.f32 %v2765, %v2771
        %v2774 = vmul.f32 %v2772, %v2772
        %v2775 = vmul.f32 %v2773, %v2773
        %v2776 = vadd.f32 %v2774, %v2775
        %2777 = vadd.xlane.f32.xlu0 %v2776
        %v2778 = vpop.xlane.xlu0 %2777
        %v2779 = vmul.f32 %v2778, %v1748
        %v2780 = vadd.f32 %v2779, 1e-05
        %v2781 = vrsqrt.pop %v2780
        %v2782 = vmul.f32 %v2772, %v2781
        %v2783 = vmul.f32 %v2773, %v2781
        %v2785 = vlaneseq
        %v2786 = vshrl.u32 %v2785, 7
        %v2787 = vsub.s32 0, %v2786
        %v2788 = vrot.slane %v2766, %v2787
        %v2789 = vlaneseq
        %v2790 = vshrl.u32 %v2789, 7
        %v2791 = vsub.s32 1, %v2790
        %v2792 = vrot.slane %v2766, %v2791
        %v2795 = vmul.f32 %v2782, %v2788
        %v2796 = vmul.f32 %v2783, %v2792
        %v2798 = vlaneseq
        %v2799 = vshrl.u32 %v2798, 7
        %v2800 = vsub.s32 0, %v2799
        %v2801 = vrot.slane %v2767, %v2800
        %v2802 = vlaneseq
        %v2803 = vshrl.u32 %v2802, 7
        %v2804 = vsub.s32 1, %v2803
        %v2805 = vrot.slane %v2767, %v2804
        %v2808 = vadd.f32 %v2795, %v2801
        %v2809 = vadd.f32 %v2796, %v2805
        %2810 = vst [vmem:[%s544] sm:$0xff] %v2808
        %2811 = vst [vmem:[%s544 + $0x8] sm:$0xff] %v2809
        %s2812 = sand.u32 %s324, 1
        %s2813 = scalar_lea.sflag [#allocation6], %s2812
        %s2814 = sand.u32 %s324, 1
        %s2815 = smul.addr %s2814, 16
        %s2816 = scalar_lea.vmem [#allocation16], %s2815
        // Predicated region
        $region101: #{encoder_block.1} parent=71 // pred_check
          %p2817 = pneg %p334
        $region102: #{encoder_block.1} parent=71 // pred_check_branch
          %2819 = sbr.rel (%p2817) target = $region104
        $region103: #{encoder_block.1} parent=71 // pred_region
          %s2821 = ssub.s32 256, 256
          %2822 = vsyncadd %s2813, %s2821
          %s2823 = smul.addr %s38, 2
          %s2824 = smul.addr %s2823, 128
          %s2825 = scalar_lea.hbm %s14, %s2824
          %s2827 = sshll.u32 %s2816, 4
          %s2828 = int_to_ptr.vmem [resolvable:$true] %s2827
          %2830 = dma.vmem_to_hbm [thread:$0]  %s2828, 256, %s2825, %s2813
        $region104: #{encoder_block.1} parent=71 // pred_fallthru
          _
      $region72: #{encoder_block.1} parent=5 // pred_fallthru
        _
      %p2831 = scmp.le.s32.totalorder 2, %s33
      // Predicated region
      $region105: #{encoder_block.1} parent=5 // pred_check
        %p2832 = pneg %p2831
      $region106: #{encoder_block.1} parent=5 // pred_check_branch
        %2834 = sbr.rel (%p2832) target = $region108
      $region107: #{encoder_block.1} parent=5 // pred_region
        %s2835 = ssub.s32 %s33, 2
        // Predicated region
        $region109: #{encoder_block.1} parent=107 // pred_check
          %p2836 = pneg %p340
        $region110: #{encoder_block.1} parent=107 // pred_check_branch
          %2838 = sbr.rel (%p2836) target = $region112
        $region111: #{encoder_block.1} parent=107 // pred_region
          %s2839 = sand.u32 %s325, 1
          %s2840 = scalar_lea.sflag [#allocation6], %s2839
          %s2841 = sand.u32 %s325, 1
          %s2842 = smul.addr %s2841, 16
          %s2843 = scalar_lea.vmem [#allocation16], %s2842
          %2844 = dma.done %s2840, 256
        $region112: #{encoder_block.1} parent=107 // pred_fallthru
          _
      $region108: #{encoder_block.1} parent=5 // pred_fallthru
        _
    $region6: #{encoder_block.1} parent=1 // loop_footer
      %s37 = sadd.s32 1, %s33
    $region7: #{encoder_block.1} parent=1 // loop_footer_branch
      %32 = sbr.rel target = $region3
    $region8: #{encoder_block.1} parent=1 // loop_exit
      _
    %2845 = vsyncpa [#allocation5], 1
    %s2846 = scalar_lea.sflag [#allocation5], 1
    %2847 = vsyncpa %s2846, 1
    %2848 = vsyncpa [#allocation8], 1
    %2849 = vsyncpa [#allocation11], 1
    %2850 = vsyncpa [#allocation14], 1
    %2851 = vsyncpa [#allocation6], 1
    %s2852 = scalar_lea.sflag [#allocation6], 1
    %2853 = vsyncpa %s2852, 1

</llo_original>
